<compile_context>
chip_gen: v7x
topology: tpu7x:2x2x1
jax: 0.10.0
libtpu: 0.0.40
codegen_flags: <defaults>
</compile_context>

<pallas_src>
import functools

import jax
import jax.numpy as jnp
from jax.experimental import pallas as pl
from jax.experimental.pallas import tpu as pltpu


_VMEM_LIMIT = 64 * 1024 * 1024


def _cparams(n_axes=2):
    return pltpu.CompilerParams(
        dimension_semantics=("parallel",) * n_axes,
        vmem_limit_bytes=_VMEM_LIMIT)


# ---------------------------------------------------------------------------
# Tiling helpers
# ---------------------------------------------------------------------------
def _pick_band(hout, wout, cin, cout, *, band_rows=None, max_bytes=1 << 20):
    """Largest row-band tb dividing hout whose flattened output block (tb*wout) is
    tile-aligned and whose blocks stay under a per-block VMEM byte budget."""
    valid = [tb for tb in range(1, hout + 1)
             if hout % tb == 0 and ((tb * wout) % 16 == 0 or tb == hout)]
    if band_rows is not None:
        capped = [tb for tb in valid if tb <= band_rows]
        return max(capped) if capped else min(valid)

    def nbytes(tb):
        return 4 * max((tb + 2) * (wout + 2) * cin, tb * wout * cout)

    fitting = [tb for tb in valid if nbytes(tb) <= max_bytes]
    return max(fitting) if fitting else min(valid)


def _pick_chunk(hw, width, *, chunk=None, max_bytes=1 << 20):
    valid = [t for t in range(1, hw + 1)
             if hw % t == 0 and (t % 16 == 0 or t == hw)]
    if chunk is not None:
        capped = [t for t in valid if t <= chunk]
        return max(capped) if capped else min(valid)
    fitting = [t for t in valid if 4 * t * width <= max_bytes]
    return max(fitting) if fitting else min(valid)


# ---------------------------------------------------------------------------
# Pallas kernels
# ---------------------------------------------------------------------------
def _conv_taps(x, w_ref, *, kh, kw, cin, tb, wout, win, padw):
    """In-VMEM patch extraction + per-dx MXU matmuls (K = kh*cin each, f32 acc).

    x: assembled window (tb + kh - 1, win, cin) including halo rows (no W padding).
    Returns the f32 accumulator (tb*wout, cout)."""
    x = x.astype(jnp.bfloat16)
    hwin = tb + kh - 1
    w = w_ref[...]
    acc = None
    for dx in range(kw):                      # dx column repack hoisted out of dy loop
        lo = dx - padw
        hi = lo + wout
        if lo < 0:
            zc = jnp.zeros((hwin, -lo, cin), jnp.bfloat16)
            col = jnp.concatenate([zc, x[:, :hi, :]], axis=1)
        elif hi > win:
            zc = jnp.zeros((hwin, hi - win, cin), jnp.bfloat16)
            col = jnp.concatenate([x[:, lo:, :], zc], axis=1)
        elif lo == 0 and hi == win:
            col = x                            # center column needs no repack
        else:
            col = x[:, lo:hi, :]
        colf = col.reshape(hwin * wout, cin)
        if kh == 1:
            patches = colf[: tb * wout, :]
        else:
            # dy taps are leading-axis views of colf; merge them along K so every
            # MXU pass contracts K = kh*cin instead of cin.
            patches = jnp.concatenate(
                [colf[dy * wout: dy * wout + tb * wout, :] for dy in range(kh)],
                axis=1)
        part = jnp.dot(patches, w[dx * kh * cin:(dx + 1) * kh * cin, :],
                       preferred_element_type=jnp.float32)
        acc = part if acc is None else acc + part
    return acc


def _conv3_band_kernel(xa_ref, xm_ref, xb_ref, w_ref, b_ref, o_ref, *,
                       cin, tb, win, relu_in, relu_out):
    """3x3 pad-1 conv on one (batch, row-band) tile.  Halo rows arrive as separate
    clamped 1-row blocks and are zeroed at the image borders in VMEM (no HBM pad)."""
    band = pl.program_id(1)
    last = pl.num_programs(1) - 1
    xa = jnp.where(band == 0, jnp.zeros_like(xa_ref[0]), xa_ref[0])
    xb = jnp.where(band == last, jnp.zeros_like(xb_ref[0]), xb_ref[0])
    x = jnp.concatenate([xa, xm_ref[0], xb], axis=0)
    if relu_in:
        x = jnp.maximum(x, 0)
    acc = _conv_taps(x, w_ref, kh=3, kw=3, cin=cin, tb=tb, wout=win, win=win, padw=1)
    acc = acc + b_ref[...]
    if relu_out:
        acc = jnp.maximum(acc, 0.0)
    o_ref[0] = acc.astype(o_ref.dtype)


def _conv2_band_kernel(xm_ref, xb_ref, w_ref, b_ref, o_ref, *,
                       cin, tb, win, relu_in, relu_out):
    """2x2 valid conv (a stride-2 4x4 conv after space-to-depth) on one row band."""
    x = jnp.concatenate([xm_ref[0], xb_ref[0]], axis=0)
    if relu_in:
        x = jnp.maximum(x, 0)
    acc = _conv_taps(x, w_ref, kh=2, kw=2, cin=cin, tb=tb, wout=win - 1, win=win,
                     padw=0)
    acc = acc + b_ref[...]
    if relu_out:
        acc = jnp.maximum(acc, 0.0)
    o_ref[0] = acc.astype(o_ref.dtype)


def _resblock_band_kernel(xa_ref, xm_ref, xb_ref, w1_ref, b1_ref, w2_ref, b2_ref,
                          o_ref, *, c, tb, win, relu_out):
    """Fused ResBlock band: ReLU -> 3x3 conv -> ReLU -> 1x1 conv -> + x [-> ReLU].
    The intermediate activation never leaves VMEM."""
    band = pl.program_id(1)
    last = pl.num_programs(1) - 1
    xa = jnp.where(band == 0, jnp.zeros_like(xa_ref[0]), xa_ref[0])
    xb = jnp.where(band == last, jnp.zeros_like(xb_ref[0]), xb_ref[0])
    xm = xm_ref[0]
    x = jnp.concatenate([xa, xm, xb], axis=0)
    acc = _conv_taps(jnp.maximum(x, 0), w1_ref, kh=3, kw=3, cin=c, tb=tb,
                     wout=win, win=win, padw=1)
    mid = jnp.maximum(acc + b1_ref[...], 0.0).astype(jnp.bfloat16)
    out = jnp.dot(mid, w2_ref[...], preferred_element_type=jnp.float32) + b2_ref[...]
    out = out + xm.reshape(tb * win, c).astype(jnp.float32)      # residual (pre-ReLU)
    if relu_out:                                                 # trailing encoder ReLU
        out = jnp.maximum(out, 0.0)
    o_ref[0] = out.astype(o_ref.dtype)


def _mm_kernel(x_ref, w_ref, b_ref, o_ref, *, relu_in, relu_out):
    """1x1 conv (pointwise matmul) on one chunk of pixels."""
    x = x_ref[0]
    if relu_in:
        x = jnp.maximum(x, 0)
    acc = jnp.dot(x.astype(jnp.bfloat16), w_ref[...],
                  preferred_element_type=jnp.float32) + b_ref[...]
    if relu_out:
        acc = jnp.maximum(acc, 0.0)
    o_ref[0] = acc.astype(o_ref.dtype)


def _quantize_kernel(z_ref, et_ref, e2_ref, o_ref, *, n_embed):
    """Nearest-codebook lookup on one pixel chunk: bf16 scores matmul (f32 acc),
    f32 argmin with first-occurrence tie-break, exact f32 one-hot gather."""
    z = z_ref[0]
    et = et_ref[...]                                   # (n_embed, d) f32
    scores = jax.lax.dot_general(
        z.astype(jnp.bfloat16), et.astype(jnp.bfloat16),
        (((1,), (1,)), ((), ())), preferred_element_type=jnp.float32)
    dist = e2_ref[...] - 2.0 * scores                  # ||z||^2 is a row constant
    dmin = jnp.min(dist, axis=1, keepdims=True)
    ii = jax.lax.broadcasted_iota(jnp.int32, dist.shape, 1).astype(jnp.float32)
    idx = jnp.min(jnp.where(dist <= dmin, ii, float(n_embed)), axis=1, keepdims=True)
    onehot = (ii == idx).astype(jnp.float32)
    o_ref[0] = jnp.dot(onehot, et, preferred_element_type=jnp.float32)


# ---------------------------------------------------------------------------
# pallas_call wrappers (grid = (batch, row_band) / (batch, pixel_chunk))
# ---------------------------------------------------------------------------
def _conv3_call(x, wm, bias, cout, *, relu_in, relu_out, band_rows=None,
                out_dtype=jnp.bfloat16):
    n, h, wd, cin = x.shape
    assert wm.shape[0] == 9 * cin
    tb = _pick_band(h, wd, cin, cout, band_rows=band_rows)
    nb = h // tb
    kernel = functools.partial(_conv3_band_kernel, cin=cin, tb=tb, win=wd,
                               relu_in=relu_in, relu_out=relu_out)
    out = pl.pallas_call(
        kernel,
        out_shape=jax.ShapeDtypeStruct((n, h * wd, cout), out_dtype),
        grid_spec=pltpu.PrefetchScalarGridSpec(
            num_scalar_prefetch=0,
            grid=(n, nb),
            in_specs=[
                pl.BlockSpec((1, 1, wd, cin),
                             lambda b, i: (b, jnp.maximum(i * tb - 1, 0), 0, 0)),
                pl.BlockSpec((1, tb, wd, cin), lambda b, i: (b, i, 0, 0)),
                pl.BlockSpec((1, 1, wd, cin),
                             lambda b, i: (b, jnp.minimum((i + 1) * tb, h - 1), 0, 0)),
                pl.BlockSpec((9 * cin, cout), lambda b, i: (0, 0)),
                pl.BlockSpec((1, cout), lambda b, i: (0, 0)),
            ],
            out_specs=pl.BlockSpec((1, tb * wd, cout), lambda b, i: (b, i, 0)),
        ),
        compiler_params=_cparams(),
    )(x, x, x, wm, bias)
    return out


def conv2d_3x3(x, wq, *, relu_in=False, relu_out=False, band_rows=None,
               out_dtype=jnp.bfloat16):
    n, h, wd, _ = x.shape
    cout = wq["w"].shape[1]
    out = _conv3_call(x, wq["w"], wq["b"], cout, relu_in=relu_in, relu_out=relu_out,
                      band_rows=band_rows, out_dtype=out_dtype)
    return out.reshape(n, h, wd, cout)


def conv_transpose2d(x, wq, *, relu_in=False, band_rows=None):
    """torch ConvTranspose2d(cin, cout, 4, stride=2, padding=1), phase-split as one
    lane-dense 3x3 conv (N = 4*cout phases) + depth-to-space in the wrapper."""
    n, h, wd, _ = x.shape
    cout4 = wq["w"].shape[1]
    cout = cout4 // 4
    y = _conv3_call(x, wq["w"], wq["b"], cout4, relu_in=relu_in, relu_out=False,
                    band_rows=band_rows)
    y = y.reshape(n, h, wd, 2, 2, cout)
    # TODO(synk): drop the 5/9 structural-zero taps per phase (four 2x2-tap per-phase
    # matmuls) and fold this depth-to-space into the kernel's output stores.
    y = jnp.transpose(y, (0, 1, 3, 2, 4, 5)).reshape(n, 2 * h, 2 * wd, cout)
    return y


def conv2d_stride2(x, wq, *, relu_in=False, relu_out=False, band_rows=None):
    """torch Conv2d(cin, cout, 4, stride=2, padding=1) = pad + space-to-depth (one
    fused XLA layout pass) + a 2x2 valid Pallas conv with K = 16*cin."""
    n, h, wd, cin = x.shape
    wm, bias = wq["w"], wq["b"]
    cout = wm.shape[1]
    assert wm.shape[0] == 16 * cin
    # TODO(synk): fold the pad + space-to-depth into the kernel's HBM->VMEM DMA.
    xp = jnp.pad(x, ((0, 0), (1, 1), (1, 1), (0, 0)))
    hp, wp = h + 2, wd + 2
    xs = xp.reshape(n, hp // 2, 2, wp // 2, 2, cin)
    xs = jnp.transpose(xs, (0, 1, 3, 2, 4, 5)).reshape(n, hp // 2, wp // 2, 4 * cin)
    hout, wout = h // 2, wd // 2
    win = wp // 2                      # = hout + 1, so the bottom halo row always exists
    cin4 = 4 * cin
    tb = _pick_band(hout, wout, cin4, cout, band_rows=band_rows)
    nb = hout // tb
    kernel = functools.partial(_conv2_band_kernel, cin=cin4, tb=tb, win=win,
                               relu_in=relu_in, relu_out=relu_out)
    out = pl.pallas_call(
        kernel,
        out_shape=jax.ShapeDtypeStruct((n, hout * wout, cout), jnp.bfloat16),
        grid_spec=pltpu.PrefetchScalarGridSpec(
            num_scalar_prefetch=0,
            grid=(n, nb),
            in_specs=[
                pl.BlockSpec((1, tb, win, cin4), lambda b, i: (b, i, 0, 0)),
                pl.BlockSpec((1, 1, win, cin4), lambda b, i: (b, (i + 1) * tb, 0, 0)),
                pl.BlockSpec((16 * cin, cout), lambda b, i: (0, 0)),
                pl.BlockSpec((1, cout), lambda b, i: (0, 0)),
            ],
            out_specs=pl.BlockSpec((1, tb * wout, cout), lambda b, i: (b, i, 0)),
        ),
        compiler_params=_cparams(),
    )(xs, xs, wm, bias)
    return out.reshape(n, hout, wout, cout)


def resblock(x, rq, *, relu_out=False, band_rows=None):
    n, h, wd, c = x.shape
    w1, w2 = rq["w1"], rq["w2"]
    cr = w1.shape[1]
    assert w1.shape[0] == 9 * c and w2.shape == (cr, c)
    tb = _pick_band(h, wd, c, max(c, cr), band_rows=band_rows)
    nb = h // tb
    kernel = functools.partial(_resblock_band_kernel, c=c, tb=tb, win=wd,
                               relu_out=relu_out)
    out = pl.pallas_call(
        kernel,
        out_shape=jax.ShapeDtypeStruct((n, h * wd, c), jnp.bfloat16),
        grid_spec=pltpu.PrefetchScalarGridSpec(
            num_scalar_prefetch=0,
            grid=(n, nb),
            in_specs=[
                pl.BlockSpec((1, 1, wd, c),
                             lambda b, i: (b, jnp.maximum(i * tb - 1, 0), 0, 0)),
                pl.BlockSpec((1, tb, wd, c), lambda b, i: (b, i, 0, 0)),
                pl.BlockSpec((1, 1, wd, c),
                             lambda b, i: (b, jnp.minimum((i + 1) * tb, h - 1), 0, 0)),
                pl.BlockSpec((9 * c, cr), lambda b, i: (0, 0)),
                pl.BlockSpec((1, cr), lambda b, i: (0, 0)),
                pl.BlockSpec((cr, c), lambda b, i: (0, 0)),
                pl.BlockSpec((1, c), lambda b, i: (0, 0)),
            ],
            out_specs=pl.BlockSpec((1, tb * wd, c), lambda b, i: (b, i, 0)),
        ),
        compiler_params=_cparams(),
    )(x, x, x, w1, rq["b1"], w2, rq["b2"])
    return out.reshape(n, h, wd, c)


def conv2d_1x1(x, wq, *, relu_in=False, relu_out=False, out_dtype=jnp.bfloat16,
               chunk=None):
    n, h, wd, cin = x.shape
    wm, bias = wq["w"], wq["b"]
    cout = wm.shape[1]
    assert wm.shape[0] == cin
    hw = h * wd
    t = _pick_chunk(hw, max(cin, cout), chunk=chunk)
    kernel = functools.partial(_mm_kernel, relu_in=relu_in, relu_out=relu_out)
    out = pl.pallas_call(
        kernel,
        out_shape=jax.ShapeDtypeStruct((n, hw, cout), out_dtype),
        grid_spec=pltpu.PrefetchScalarGridSpec(
            num_scalar_prefetch=0,
            grid=(n, hw // t),
            in_specs=[
                pl.BlockSpec((1, t, cin), lambda b, i: (b, i, 0)),
                pl.BlockSpec((cin, cout), lambda b, i: (0, 0)),
                pl.BlockSpec((1, cout), lambda b, i: (0, 0)),
            ],
            out_specs=pl.BlockSpec((1, t, cout), lambda b, i: (b, i, 0)),
        ),
        compiler_params=_cparams(),
    )(x.reshape(n, hw, cin), wm, bias)
    return out.reshape(n, h, wd, cout)


def quantize(z, eq, *, chunk=None):
    n, h, wd, d = z.shape
    et, e2 = eq["et"], eq["e2"]
    n_embed = et.shape[0]
    hw = h * wd
    t = _pick_chunk(hw, n_embed + 2 * d, chunk=chunk)
    kernel = functools.partial(_quantize_kernel, n_embed=n_embed)
    q = pl.pallas_call(
        kernel,
        out_shape=jax.ShapeDtypeStruct((n, hw, d), jnp.float32),
        grid_spec=pltpu.PrefetchScalarGridSpec(
            num_scalar_prefetch=0,
            grid=(n, hw // t),
            in_specs=[
                pl.BlockSpec((1, t, d), lambda b, i: (b, i, 0)),
                pl.BlockSpec((n_embed, d), lambda b, i: (0, 0)),
                pl.BlockSpec((1, n_embed), lambda b, i: (0, 0)),
            ],
            out_specs=pl.BlockSpec((1, t, d), lambda b, i: (b, i, 0)),
        ),
        compiler_params=_cparams(),
    )(z.reshape(n, hw, d), et, e2)
    return q.reshape(n, h, wd, d)


# ---------------------------------------------------------------------------
# Parameter preparation (done once, outside the jitted forward)
# ---------------------------------------------------------------------------
def _prep_conv(w, b):
    """torch Conv2d weight (cout, cin, kh, kw) -> (kw*kh*cin, cout), K = (dx, dy, ci)."""
    cout, cin, kh, kw = w.shape
    wm = jnp.transpose(w, (3, 2, 1, 0)).reshape(kh * kw * cin, cout).astype(jnp.bfloat16)
    return {"w": wm, "b": b.reshape(1, cout).astype(jnp.float32)}


def _prep_conv_s2(w, b):
    """torch Conv2d(cin,cout,4,s=2,p=1) weight -> (16*cin, cout) for the 2x2 conv on
    the space-to-depth'd input; K = (dx, dy, ra, rb, ci) to match the s2d packing."""
    cout, cin = int(w.shape[0]), int(w.shape[1])
    w4 = w.reshape(cout, cin, 2, 2, 2, 2)                 # [o, ci, dy, ra, dx, rb]
    wm = jnp.transpose(w4, (4, 2, 3, 5, 1, 0)).reshape(16 * cin, cout)
    return {"w": wm.astype(jnp.bfloat16),
            "b": b.reshape(1, cout).astype(jnp.float32)}


def _prep_deconv(w, b):
    """torch ConvTranspose2d(4x4,s=2,p=1) weight (cin,cout,4,4) -> a 3x3-conv weight
    (9*cin, 4*cout) emitting the four output phases along the lane axis."""
    cin, cout = int(w.shape[0]), int(w.shape[1])
    kmap = ({0: 3, 1: 1}, {1: 2, 2: 0})    # kmap[phase][tap offset] -> kernel index
    wbig = jnp.zeros((3, 3, cin, 2, 2, cout), jnp.float32)   # [dx, dy, ci, ry, rx, co]
    for ry in range(2):
        for dy in range(3):
            a = kmap[ry].get(dy)
            if a is None:
                continue
            for rx in range(2):
                for dx in range(3):
                    bb = kmap[rx].get(dx)
                    if bb is None:
                        continue
                    wbig = wbig.at[dx, dy, :, ry, rx, :].set(w[:, :, a, bb])
    wm = wbig.reshape(9 * cin, 4 * cout).astype(jnp.bfloat16)
    bias = jnp.tile(b, 4).reshape(1, 4 * cout).astype(jnp.float32)
    return {"w": wm, "b": bias}


def _prep_res(rb):
    cr, c = int(rb["w1"].shape[0]), int(rb["w1"].shape[1])
    w1 = jnp.transpose(rb["w1"], (3, 2, 1, 0)).reshape(9 * c, cr).astype(jnp.bfloat16)
    w2 = jnp.transpose(rb["w2"][:, :, 0, 0], (1, 0)).astype(jnp.bfloat16)   # (cr, c)
    return {"w1": w1, "b1": rb["b1"].reshape(1, cr).astype(jnp.float32),
            "w2": w2, "b2": rb["b2"].reshape(1, c).astype(jnp.float32)}


def _prep_embed(embed):
    et = jnp.transpose(embed).astype(jnp.float32)           # (n_embed, d)
    e2 = jnp.sum(embed.astype(jnp.float32) ** 2, axis=0).reshape(1, -1)
    return {"et": et, "e2": e2}


def prepare_params(params):
    def enc(p, stride):
        q = {"c1": _prep_conv_s2(p["c1_w"], p["c1_b"])}
        if stride == 4:
            q["c2"] = _prep_conv_s2(p["c2_w"], p["c2_b"])
            q["c3"] = _prep_conv(p["c3_w"], p["c3_b"])
        else:
            q["c2"] = _prep_conv(p["c2_w"], p["c2_b"])
        q["res"] = [_prep_res(rb) for rb in p["res"]]
        return q

    def dec(p, stride):
        q = {"cin": _prep_conv(p["cin_w"], p["cin_b"]),
             "res": [_prep_res(rb) for rb in p["res"]],
             "d1": _prep_deconv(p["d1_w"], p["d1_b"])}
        if stride == 4:
            q["d2"] = _prep_deconv(p["d2_w"], p["d2_b"])
        return q

    return {
        "enc_b": enc(params["enc_b"], 4),
        "enc_t": enc(params["enc_t"], 2),
        "dec_t": dec(params["dec_t"], 2),
        "dec": dec(params["dec"], 4),
        "qconv_t": _prep_conv(params["qconv_t_w"], params["qconv_t_b"]),
        "qconv_b": _prep_conv(params["qconv_b_w"], params["qconv_b_b"]),
        "up_t": _prep_deconv(params["up_t_w"], params["up_t_b"]),
        "embed_t": _prep_embed(params["embed_t"]),
        "embed_b": _prep_embed(params["embed_b"]),
    }


# ---------------------------------------------------------------------------
# VQ-VAE forward (Pallas path), all NHWC internally, bf16 inter-layer activations
# ---------------------------------------------------------------------------
def encoder_forward(x, p, stride):
    if stride == 4:
        x = conv2d_stride2(x, p["c1"], relu_out=True)
        x = conv2d_stride2(x, p["c2"], relu_out=True)
        x = conv2d_3x3(x, p["c3"])
    else:
        x = conv2d_stride2(x, p["c1"], relu_out=True)
        x = conv2d_3x3(x, p["c2"])
    nres = len(p["res"])
    for i, rb in enumerate(p["res"]):
        x = resblock(x, rb, relu_out=(i == nres - 1))   # trailing encoder ReLU fused
    if nres == 0:
        x = jnp.maximum(x, 0)
    return x


def decoder_forward(x, p, stride):
    x = conv2d_3x3(x, p["cin"])
    for rb in p["res"]:
        x = resblock(x, rb)
    # the Sequential's ReLU before the first deconv is fused as its relu_in
    x = conv_transpose2d(x, p["d1"], relu_in=True)
    if stride == 4:
        x = conv_transpose2d(x, p["d2"], relu_in=True)
    return x


def vqvae_forward(x_nchw, prep, *, return_aux=False):
    x = jnp.transpose(x_nchw, (0, 2, 3, 1)).astype(jnp.bfloat16)   # NCHW -> NHWC
    enc_b = encoder_forward(x, prep["enc_b"], 4)
    enc_t = encoder_forward(enc_b, prep["enc_t"], 2)
    qt_in = conv2d_1x1(enc_t, prep["qconv_t"])
    quant_t = quantize(qt_in, prep["embed_t"])
    diff_t = jnp.mean((quant_t - qt_in.astype(jnp.float32)) ** 2)
    dec_t = decoder_forward(quant_t, prep["dec_t"], 2)
    qb_in = conv2d_1x1(jnp.concatenate([dec_t, enc_b], axis=-1), prep["qconv_b"])
    quant_b = quantize(qb_in, prep["embed_b"])
    diff_b = jnp.mean((quant_b - qb_in.astype(jnp.float32)) ** 2)
    up_t = conv_transpose2d(quant_t, prep["up_t"])
    dec = decoder_forward(
        jnp.concatenate([up_t, quant_b.astype(jnp.bfloat16)], axis=-1), prep["dec"], 4)
    dec = jnp.transpose(dec, (0, 3, 1, 2)).astype(jnp.float32)      # NHWC -> NCHW
    diff = (diff_t + diff_b).reshape(1)
    if return_aux:
        aux = {"enc_b": enc_b, "qt_in": qt_in, "quant_t": quant_t,
               "qb_in": qb_in, "quant_b": quant_b}
        return dec, diff, aux
    return dec, diff


# ---------------------------------------------------------------------------
# Pure-JAX (XLA) reference with the SAME dtype policy, used only for validation
# ---------------------------------------------------------------------------
def _ref_conv_f32(x, w, b, *, stride=1, pad=0, relu_in=False):
    if relu_in:
        x = jnp.maximum(x, 0)
    rhs = jnp.transpose(w, (2, 3, 1, 0)).astype(jnp.bfloat16)       # HWIO
    y = jax.lax.conv_general_dilated(
        x.astype(jnp.bfloat16), rhs, (stride, stride), [(pad, pad), (pad, pad)],
        dimension_numbers=("NHWC", "HWIO", "NHWC"),
        preferred_element_type=jnp.float32)
    return y + b.astype(jnp.float32)


def _ref_conv(x, w, b, *, stride=1, pad=0, relu_in=False, relu_out=False):
    y = _ref_conv_f32(x, w, b, stride=stride, pad=pad, relu_in=relu_in)
    if relu_out:
        y = jnp.maximum(y, 0.0)
    return y.astype(jnp.bfloat16)


def _ref_convT(x, w, b, *, relu_in=False):
    if relu_in:
        x = jnp.maximum(x, 0)
    wf = jnp.flip(w, axis=(2, 3))
    rhs = jnp.transpose(wf, (2, 3, 0, 1)).astype(jnp.bfloat16)      # HWIO (I = cin)
    y = jax.lax.conv_general_dilated(
        x.astype(jnp.bfloat16), rhs, (1, 1), [(2, 2), (2, 2)], lhs_dilation=(2, 2),
        dimension_numbers=("NHWC", "HWIO", "NHWC"),
        preferred_element_type=jnp.float32)
    return (y + b.astype(jnp.float32)).astype(jnp.bfloat16)


def _ref_resblock(x, rb, *, relu_out=False):
    h1 = _ref_conv(x, rb["w1"], rb["b1"], pad=1, relu_in=True, relu_out=True)
    h2 = _ref_conv_f32(h1, rb["w2"], rb["b2"], pad=0)
    out = x.astype(jnp.float32) + h2
    if relu_out:
        out = jnp.maximum(out, 0.0)
    return out.astype(jnp.bfloat16)


def _ref_encoder(x, p, stride):
    if stride == 4:
        x = _ref_conv(x, p["c1_w"], p["c1_b"], stride=2, pad=1, relu_out=True)
        x = _ref_conv(x, p["c2_w"], p["c2_b"], stride=2, pad=1, relu_out=True)
        x = _ref_conv(x, p["c3_w"], p["c3_b"], pad=1)
    else:
        x = _ref_conv(x, p["c1_w"], p["c1_b"], stride=2, pad=1, relu_out=True)
        x = _ref_conv(x, p["c2_w"], p["c2_b"], pad=1)
    nres = len(p["res"])
    for i, rb in enumerate(p["res"]):
        x = _ref_resblock(x, rb, relu_out=(i == nres - 1))
    if nres == 0:
        x = jnp.maximum(x, 0)
    return x


def _ref_decoder(x, p, stride):
    x = _ref_conv(x, p["cin_w"], p["cin_b"], pad=1)
    for rb in p["res"]:
        x = _ref_resblock(x, rb)
    x = _ref_convT(x, p["d1_w"], p["d1_b"], relu_in=True)
    if stride == 4:
        x = _ref_convT(x, p["d2_w"], p["d2_b"], relu_in=True)
    return x


def _ref_quantize(z, embed):
    d = embed.shape[0]
    flat = z.reshape(-1, d).astype(jnp.float32)
    dist = (jnp.sum(flat ** 2, axis=1, keepdims=True) - 2.0 * flat @ embed
            + jnp.sum(embed ** 2, axis=0, keepdims=True))
    idx = jnp.argmin(dist, axis=1)
    return jnp.take(jnp.transpose(embed), idx, axis=0).reshape(z.shape).astype(jnp.float32)


def ref_vqvae_forward(x_nchw, params, *, return_aux=False):
    x = jnp.transpose(x_nchw, (0, 2, 3, 1)).astype(jnp.bfloat16)
    enc_b = _ref_encoder(x, params["enc_b"], 4)
    enc_t = _ref_encoder(enc_b, params["enc_t"], 2)
    qt_in = _ref_conv(enc_t, params["qconv_t_w"], params["qconv_t_b"], pad=0)
    quant_t = _ref_quantize(qt_in, params["embed_t"])
    diff_t = jnp.mean((quant_t - qt_in.astype(jnp.float32)) ** 2)
    dec_t = _ref_decoder(quant_t, params["dec_t"], 2)
    qb_in = _ref_conv(jnp.concatenate([dec_t, enc_b], axis=-1),
                      params["qconv_b_w"], params["qconv_b_b"], pad=0)
    quant_b = _ref_quantize(qb_in, params["embed_b"])
    diff_b = jnp.mean((quant_b - qb_in.astype(jnp.float32)) ** 2)
    up_t = _ref_convT(quant_t, params["up_t_w"], params["up_t_b"])
    dec = _ref_decoder(
        jnp.concatenate([up_t, quant_b.astype(jnp.bfloat16)], axis=-1), params["dec"], 4)
    dec = jnp.transpose(dec, (0, 3, 1, 2)).astype(jnp.float32)
    diff = (diff_t + diff_b).reshape(1)
    if return_aux:
        return dec, diff, {"enc_b": enc_b, "qt_in": qt_in, "quant_t": quant_t,
                           "qb_in": qb_in, "quant_b": quant_b}
    return dec, diff


# ---------------------------------------------------------------------------
# Deterministic parameter init (torch layouts) + smoke test
# ---------------------------------------------------------------------------
def init_params(key, *, in_channel=3, channel=32, n_res_block=2, n_res_channel=8,
                embed_dim=16, n_embed=64):
    kit = iter(jax.random.split(key, 256))

    def conv_p(cout, cin, k):
        w = jax.random.normal(next(kit), (cout, cin, k, k), jnp.float32)
        w = w / jnp.sqrt(float(cin * k * k))
        b = 0.1 * jax.random.normal(next(kit), (cout,), jnp.float32)
        return w, b

    def deconv_p(cin, cout):
        w = jax.random.normal(next(kit), (cin, cout, 4, 4), jnp.float32)
        w = w / jnp.sqrt(float(cin * 16))
        b = 0.1 * jax.random.normal(next(kit), (cout,), jnp.float32)
        return w, b

    def res_p(c, cr):
        w1, b1 = conv_p(cr, c, 3)
        w2, b2 = conv_p(c, cr, 1)
        return {"w1": w1, "b1": b1, "w2": w2, "b2": b2}

    def encoder_p(cin, c, stride):
        p = {}
        if stride == 4:
            p["c1_w"], p["c1_b"] = conv_p(c // 2, cin, 4)
            p["c2_w"], p["c2_b"] = conv_p(c, c // 2, 4)
            p["c3_w"], p["c3_b"] = conv_p(c, c, 3)
        else:
            p["c1_w"], p["c1_b"] = conv_p(c // 2, cin, 4)
            p["c2_w"], p["c2_b"] = conv_p(c, c // 2, 3)
        p["res"] = [res_p(c, n_res_channel) for _ in range(n_res_block)]
        return p

    def decoder_p(cin, cout, c, stride):
        p = {}
        p["cin_w"], p["cin_b"] = conv_p(c, cin, 3)
        p["res"] = [res_p(c, n_res_channel) for _ in range(n_res_block)]
        if stride == 4:
            p["d1_w"], p["d1_b"] = deconv_p(c, c // 2)
            p["d2_w"], p["d2_b"] = deconv_p(c // 2, cout)
        else:
            p["d1_w"], p["d1_b"] = deconv_p(c, cout)
        return p

    params = {
        "enc_b": encoder_p(in_channel, channel, 4),
        "enc_t": encoder_p(channel, channel, 2),
        "dec_t": decoder_p(embed_dim, embed_dim, channel, 2),
        "dec": decoder_p(2 * embed_dim, in_channel, channel, 4),
        "embed_t": jax.random.normal(next(kit), (embed_dim, n_embed), jnp.float32),
        "embed_b": jax.random.normal(next(kit), (embed_dim, n_embed), jnp.float32),
    }
    params["qconv_t_w"], params["qconv_t_b"] = conv_p(embed_dim, channel, 1)
    params["qconv_b_w"], params["qconv_b_b"] = conv_p(embed_dim, embed_dim + channel, 1)
    params["up_t_w"], params["up_t_b"] = deconv_p(embed_dim, embed_dim)
    return params


def _check(name, got, want, atol, rtol):
    got = jnp.asarray(jax.block_until_ready(got)).astype(jnp.float32)
    want = jnp.asarray(jax.block_until_ready(want)).astype(jnp.float32)
    if got.shape != want.shape:
        raise AssertionError(f"{name}: shape mismatch {got.shape} vs {want.shape}")
    if not bool(jnp.allclose(got, want, atol=atol, rtol=rtol)):
        err = float(jnp.max(jnp.abs(got - want)))
        raise AssertionError(f"{name}: mismatch, max abs err = {err}")


def _nearest_codes(q, embed):
    d = embed.shape[0]
    flat = q.reshape(-1, d).astype(jnp.float32)
    et = jnp.transpose(embed).astype(jnp.float32)          # (n_embed, d)
    d2 = (jnp.sum(flat ** 2, axis=1, keepdims=True) - 2.0 * flat @ et.T
          + jnp.sum(et ** 2, axis=1)[None, :])
    return jnp.argmin(d2, axis=1)


if __name__ == "__main__":
    key = jax.random.PRNGKey(0)
    k_x, k_p, k_u = jax.random.split(key, 3)

    # small-but-representative config (real model: channel=128, n_res_channel=32,
    # embed_dim=64, n_embed=512, 256x256 images)
    params = init_params(k_p, in_channel=3, channel=32, n_res_block=2,
                         n_res_channel=8, embed_dim=16, n_embed=64)
    prep = prepare_params(params)
    x = jax.random.normal(k_x, (2, 3, 32, 32), jnp.float32)        # NCHW, like torch

    # ---- per-kernel checks vs XLA references on identical bf16 inputs; small
    # ---- band_rows force the multi-band (halo clamping / edge-zeroing) code paths.
    ku = iter(jax.random.split(k_u, 16))
    xt = jax.random.normal(next(ku), (2, 16, 16, 8), jnp.float32).astype(jnp.bfloat16)
    w3 = 0.2 * jax.random.normal(next(ku), (16, 8, 3, 3), jnp.float32)
    b3 = 0.1 * jax.random.normal(next(ku), (16,), jnp.float32)
    _check("conv3x3", conv2d_3x3(xt, _prep_conv(w3, b3), band_rows=4),
           _ref_conv(xt, w3, b3, pad=1), 2e-2, 2e-2)
    w4 = 0.2 * jax.random.normal(next(ku), (16, 8, 4, 4), jnp.float32)
    b4 = 0.1 * jax.random.normal(next(ku), (16,), jnp.float32)
    _check("conv4x4_s2", conv2d_stride2(xt, _prep_conv_s2(w4, b4), band_rows=2),
           _ref_conv(xt, w4, b4, stride=2, pad=1), 2e-2, 2e-2)
    wt = 0.2 * jax.random.normal(next(ku), (8, 16, 4, 4), jnp.float32)
    bt = 0.1 * jax.random.normal(next(ku), (16,), jnp.float32)
    _check("deconv4x4_s2", conv_transpose2d(xt, _prep_deconv(wt, bt), band_rows=4),
           _ref_convT(xt, wt, bt), 2e-2, 2e-2)
    rbp = {"w1": 0.2 * jax.random.normal(next(ku), (4, 8, 3, 3), jnp.float32),
           "b1": 0.1 * jax.random.normal(next(ku), (4,), jnp.float32),
           "w2": 0.2 * jax.random.normal(next(ku), (8, 4, 1, 1), jnp.float32),
           "b2": 0.1 * jax.random.normal(next(ku), (8,), jnp.float32)}
    _check("resblock", resblock(xt, _prep_res(rbp), band_rows=4),
           _ref_resblock(xt, rbp), 2e-2, 2e-2)

    # quantize: the chosen code must achieve the f32 minimum distance unless the
    # bf16-scored argmin hit a genuine near-tie.
    emb = jax.random.normal(next(ku), (16, 64), jnp.float32)
    zq = jax.random.normal(next(ku), (2, 8, 8, 16), jnp.float32).astype(jnp.bfloat16)
    q_pl = jax.block_until_ready(quantize(zq, _prep_embed(emb)))
    assert q_pl.shape == zq.shape
    flat = zq.reshape(-1, 16).astype(jnp.float32)
    dist_ref = (jnp.sum(flat ** 2, 1, keepdims=True) - 2.0 * flat @ emb
                + jnp.sum(emb ** 2, 0, keepdims=True))
    two = -jax.lax.top_k(-dist_ref, 2)[0]
    dmin, dsec = two[:, 0], two[:, 1]
    d_pl = jnp.sum((q_pl.reshape(-1, 16) - flat) ** 2, axis=1)
    ok = (d_pl <= dmin + 1e-2 * (1.0 + dmin)) | ((dsec - dmin) <= 0.5)
    assert bool(jnp.all(ok)), "quantize picked a non-nearest code outside tie margin"

    # ---- full VQ-VAE forward: Pallas vs pure-JAX/XLA reference ----
    fwd = jax.jit(functools.partial(vqvae_forward, return_aux=True))
    rfwd = jax.jit(functools.partial(ref_vqvae_forward, return_aux=True))
    dec, diff, aux = jax.block_until_ready(fwd(x, prep))
    rdec, rdiff, raux = jax.block_until_ready(rfwd(x, params))

    assert dec.shape == x.shape, dec.shape
    assert diff.shape == (1,), diff.shape

    _check("enc_b", aux["enc_b"], raux["enc_b"], 5e-2, 5e-2)
    _check("qt_in", aux["qt_in"], raux["qt_in"], 5e-2, 5e-2)
    # codebook argmins are discrete: only compare downstream tensors when both float
    # paths actually picked the same codes (a near-tie flip is a legitimate numerical
    # outcome, not a kernel bug).
    ct_p = _nearest_codes(aux["quant_t"], params["embed_t"])
    ct_r = _nearest_codes(raux["quant_t"], params["embed_t"])
    if bool(jnp.all(ct_p == ct_r)):
        _check("qb_in", aux["qb_in"], raux["qb_in"], 5e-2, 5e-2)
        cb_p = _nearest_codes(aux["quant_b"], params["embed_b"])
        cb_r = _nearest_codes(raux["quant_b"], params["embed_b"])
        if bool(jnp.all(cb_p == cb_r)):
            _check("decoded", dec, rdec, 5e-2, 5e-2)
            _check("diff", diff, rdiff, 5e-2, 5e-2)

    print("KERNEL_OK")
</pallas_src>

<mosaic_0001>
module attributes {stable_mosaic.version = 11 : i64} {
  func.func @_conv3_band_kernel(%arg0: i32, %arg1: i32, %arg2: memref<1x1x16x8xbf16, #tpu.memory_space<vmem>>, %arg3: memref<1x4x16x8xbf16, #tpu.memory_space<vmem>>, %arg4: memref<1x1x16x8xbf16, #tpu.memory_space<vmem>>, %arg5: memref<72x16xbf16, #tpu.memory_space<vmem>>, %arg6: memref<1x16xf32, #tpu.memory_space<vmem>>, %arg7: memref<1x64x16xbf16, #tpu.memory_space<vmem>>) attributes {dimension_semantics = [#tpu.dimension_semantics<parallel>, #tpu.dimension_semantics<parallel>], iteration_bounds = array<i64: 2, 4>, scalar_prefetch = 0 : i64, scratch_operands = 0 : i64, tpu.core_type = #tpu.core_type<tc>, window_params = [{transform_indices = @transform_0, window_bounds = array<i64: 1, 1, 16, 8>}, {transform_indices = @transform_1, window_bounds = array<i64: 1, 4, 16, 8>}, {transform_indices = @transform_2, window_bounds = array<i64: 1, 1, 16, 8>}, {pipeline_mode = #tpu.pipeline_mode<synchronous>, transform_indices = @transform_3, window_bounds = array<i64: 72, 16>}, {pipeline_mode = #tpu.pipeline_mode<synchronous>, transform_indices = @transform_4, window_bounds = array<i64: 1, 16>}, {transform_indices = @transform_5, window_bounds = array<i64: 1, 64, 16>}]} {
    %c0_i32 = arith.constant 0 : i32
    %0 = arith.cmpi eq, %arg1, %c0_i32 : i32
    %cst = arith.constant 0.000000e+00 : bf16
    %1 = vector.broadcast %cst : bf16 to vector<1x16x8xbf16>
    %c0 = arith.constant 0 : index
    %c0_0 = arith.constant 0 : index
    %c0_1 = arith.constant 0 : index
    %c0_2 = arith.constant 0 : index
    %2 = vector.load %arg2[%c0, %c0_0, %c0_1, %c0_2] : memref<1x1x16x8xbf16, #tpu.memory_space<vmem>>, vector<1x1x16x8xbf16>
    %3 = vector.shape_cast %2 : vector<1x1x16x8xbf16> to vector<1x16x8xbf16>
    %4 = arith.select %0, %1, %3 : vector<1x16x8xbf16>
    %c3_i32 = arith.constant 3 : i32
    %5 = arith.cmpi eq, %arg1, %c3_i32 : i32
    %cst_3 = arith.constant 0.000000e+00 : bf16
    %6 = vector.broadcast %cst_3 : bf16 to vector<1x16x8xbf16>
    %c0_4 = arith.constant 0 : index
    %c0_5 = arith.constant 0 : index
    %c0_6 = arith.constant 0 : index
    %c0_7 = arith.constant 0 : index
    %7 = vector.load %arg4[%c0_4, %c0_5, %c0_6, %c0_7] : memref<1x1x16x8xbf16, #tpu.memory_space<vmem>>, vector<1x1x16x8xbf16>
    %8 = vector.shape_cast %7 : vector<1x1x16x8xbf16> to vector<1x16x8xbf16>
    %9 = arith.select %5, %6, %8 : vector<1x16x8xbf16>
    %c0_8 = arith.constant 0 : index
    %c0_9 = arith.constant 0 : index
    %c0_10 = arith.constant 0 : index
    %c0_11 = arith.constant 0 : index
    %10 = vector.load %arg3[%c0_8, %c0_9, %c0_10, %c0_11] : memref<1x4x16x8xbf16, #tpu.memory_space<vmem>>, vector<1x4x16x8xbf16>
    %11 = vector.shape_cast %10 : vector<1x4x16x8xbf16> to vector<4x16x8xbf16>
    %12 = tpu.concatenate %4, %11, %9 in 0 : vector<1x16x8xbf16>, vector<4x16x8xbf16>, vector<1x16x8xbf16> -> vector<6x16x8xbf16>
    %c0_12 = arith.constant 0 : index
    %c0_13 = arith.constant 0 : index
    %13 = vector.load %arg5[%c0_12, %c0_13] : memref<72x16xbf16, #tpu.memory_space<vmem>>, vector<72x16xbf16>
    %cst_14 = arith.constant 0.000000e+00 : bf16
    %14 = vector.broadcast %cst_14 : bf16 to vector<6x1x8xbf16>
    %15 = vector.extract_strided_slice %12 {offsets = [0, 0, 0], sizes = [6, 15, 8], strides = [1, 1, 1]} : vector<6x16x8xbf16> to vector<6x15x8xbf16>
    %16 = tpu.concatenate %14, %15 in 1 : vector<6x1x8xbf16>, vector<6x15x8xbf16> -> vector<6x16x8xbf16>
    %17 = vector.shape_cast %16 : vector<6x16x8xbf16> to vector<96x8xbf16>
    %18 = vector.extract_strided_slice %17 {offsets = [0, 0], sizes = [64, 8], strides = [1, 1]} : vector<96x8xbf16> to vector<64x8xbf16>
    %19 = vector.extract_strided_slice %17 {offsets = [16, 0], sizes = [64, 8], strides = [1, 1]} : vector<96x8xbf16> to vector<64x8xbf16>
    %20 = vector.extract_strided_slice %17 {offsets = [32, 0], sizes = [64, 8], strides = [1, 1]} : vector<96x8xbf16> to vector<64x8xbf16>
    %21 = tpu.concatenate %18, %19, %20 in 1 : vector<64x8xbf16>, vector<64x8xbf16>, vector<64x8xbf16> -> vector<64x24xbf16>
    %22 = vector.extract_strided_slice %13 {offsets = [0, 0], sizes = [24, 16], strides = [1, 1]} : vector<72x16xbf16> to vector<24x16xbf16>
    %cst_15 = arith.constant dense<0.000000e+00> : vector<64x16xf32>
    %23 = tpu.matmul %21, %22, %cst_15 {dimension_numbers = #tpu.dot_dimension_numbers<[1], [0], [0], [1], [0, 0, 1, 1], [], []>} : vector<64x24xbf16>, vector<24x16xbf16>, vector<64x16xf32> -> vector<64x16xf32>
    %24 = vector.shape_cast %12 : vector<6x16x8xbf16> to vector<96x8xbf16>
    %25 = vector.extract_strided_slice %24 {offsets = [0, 0], sizes = [64, 8], strides = [1, 1]} : vector<96x8xbf16> to vector<64x8xbf16>
    %26 = vector.extract_strided_slice %24 {offsets = [16, 0], sizes = [64, 8], strides = [1, 1]} : vector<96x8xbf16> to vector<64x8xbf16>
    %27 = vector.extract_strided_slice %24 {offsets = [32, 0], sizes = [64, 8], strides = [1, 1]} : vector<96x8xbf16> to vector<64x8xbf16>
    %28 = tpu.concatenate %25, %26, %27 in 1 : vector<64x8xbf16>, vector<64x8xbf16>, vector<64x8xbf16> -> vector<64x24xbf16>
    %29 = vector.extract_strided_slice %13 {offsets = [24, 0], sizes = [24, 16], strides = [1, 1]} : vector<72x16xbf16> to vector<24x16xbf16>
    %cst_16 = arith.constant dense<0.000000e+00> : vector<64x16xf32>
    %30 = tpu.matmul %28, %29, %cst_16 {dimension_numbers = #tpu.dot_dimension_numbers<[1], [0], [0], [1], [0, 0, 1, 1], [], []>} : vector<64x24xbf16>, vector<24x16xbf16>, vector<64x16xf32> -> vector<64x16xf32>
    %31 = arith.addf %23, %30 : vector<64x16xf32>
    %cst_17 = arith.constant 0.000000e+00 : bf16
    %32 = vector.broadcast %cst_17 : bf16 to vector<6x1x8xbf16>
    %33 = vector.extract_strided_slice %12 {offsets = [0, 1, 0], sizes = [6, 15, 8], strides = [1, 1, 1]} : vector<6x16x8xbf16> to vector<6x15x8xbf16>
    %34 = tpu.concatenate %33, %32 in 1 : vector<6x15x8xbf16>, vector<6x1x8xbf16> -> vector<6x16x8xbf16>
    %35 = vector.shape_cast %34 : vector<6x16x8xbf16> to vector<96x8xbf16>
    %36 = vector.extract_strided_slice %35 {offsets = [0, 0], sizes = [64, 8], strides = [1, 1]} : vector<96x8xbf16> to vector<64x8xbf16>
    %37 = vector.extract_strided_slice %35 {offsets = [16, 0], sizes = [64, 8], strides = [1, 1]} : vector<96x8xbf16> to vector<64x8xbf16>
    %38 = vector.extract_strided_slice %35 {offsets = [32, 0], sizes = [64, 8], strides = [1, 1]} : vector<96x8xbf16> to vector<64x8xbf16>
    %39 = tpu.concatenate %36, %37, %38 in 1 : vector<64x8xbf16>, vector<64x8xbf16>, vector<64x8xbf16> -> vector<64x24xbf16>
    %40 = vector.extract_strided_slice %13 {offsets = [48, 0], sizes = [24, 16], strides = [1, 1]} : vector<72x16xbf16> to vector<24x16xbf16>
    %cst_18 = arith.constant dense<0.000000e+00> : vector<64x16xf32>
    %41 = tpu.matmul %39, %40, %cst_18 {dimension_numbers = #tpu.dot_dimension_numbers<[1], [0], [0], [1], [0, 0, 1, 1], [], []>} : vector<64x24xbf16>, vector<24x16xbf16>, vector<64x16xf32> -> vector<64x16xf32>
    %42 = arith.addf %31, %41 : vector<64x16xf32>
    %c0_19 = arith.constant 0 : index
    %c0_20 = arith.constant 0 : index
    %43 = vector.load %arg6[%c0_19, %c0_20] : memref<1x16xf32, #tpu.memory_space<vmem>>, vector<1x16xf32>
    %44 = vector.broadcast %43 : vector<1x16xf32> to vector<64x16xf32>
    %45 = arith.addf %42, %44 : vector<64x16xf32>
    %46 = arith.truncf %45 : vector<64x16xf32> to vector<64x16xbf16>
    %c0_21 = arith.constant 0 : index
    %c0_22 = arith.constant 0 : index
    %c0_23 = arith.constant 0 : index
    %47 = vector.load %arg7[%c0_21, %c0_22, %c0_23] : memref<1x64x16xbf16, #tpu.memory_space<vmem>>, vector<1x64x16xbf16>
    %48 = vector.shape_cast %47 : vector<1x64x16xbf16> to vector<64x16xbf16>
    %49 = vector.shape_cast %46 : vector<64x16xbf16> to vector<1x64x16xbf16>
    tpu.vector_store %arg7[%c0_21, %c0_22, %c0_23], %49 {strides = array<i32>} : memref<1x64x16xbf16, #tpu.memory_space<vmem>>, vector<1x64x16xbf16>,
    return
  }
  func.func @transform_0(%arg0: i32, %arg1: i32) -> (i32, i32, i32, i32) {
    %c4_i32 = arith.constant 4 : i32
    %0 = arith.muli %arg1, %c4_i32 : i32
    %c1_i32 = arith.constant 1 : i32
    %1 = arith.subi %0, %c1_i32 : i32
    %c0_i32 = arith.constant 0 : i32
    %2 = arith.maxsi %1, %c0_i32 : i32
    %c0_i32_0 = arith.constant 0 : i32
    %c0_i32_1 = arith.constant 0 : i32
    %c0_i32_2 = arith.constant 0 : i32
    return %arg0, %2, %c0_i32_0, %c0_i32_1 : i32, i32, i32, i32
  }
  func.func @transform_1(%arg0: i32, %arg1: i32) -> (i32, i32, i32, i32) {
    %c0_i32 = arith.constant 0 : i32
    %c0_i32_0 = arith.constant 0 : i32
    %c0_i32_1 = arith.constant 0 : i32
    return %arg0, %arg1, %c0_i32, %c0_i32_0 : i32, i32, i32, i32
  }
  func.func @transform_2(%arg0: i32, %arg1: i32) -> (i32, i32, i32, i32) {
    %c1_i32 = arith.constant 1 : i32
    %0 = arith.addi %arg1, %c1_i32 : i32
    %c4_i32 = arith.constant 4 : i32
    %1 = arith.muli %0, %c4_i32 : i32
    %c15_i32 = arith.constant 15 : i32
    %2 = arith.minsi %1, %c15_i32 : i32
    %c0_i32 = arith.constant 0 : i32
    %c0_i32_0 = arith.constant 0 : i32
    %c0_i32_1 = arith.constant 0 : i32
    return %arg0, %2, %c0_i32, %c0_i32_0 : i32, i32, i32, i32
  }
  func.func @transform_3(%arg0: i32, %arg1: i32) -> (i32, i32) {
    %c0_i32 = arith.constant 0 : i32
    %c0_i32_0 = arith.constant 0 : i32
    %c0_i32_1 = arith.constant 0 : i32
    return %c0_i32, %c0_i32_0 : i32, i32
  }
  func.func @transform_4(%arg0: i32, %arg1: i32) -> (i32, i32) {
    %c0_i32 = arith.constant 0 : i32
    %c0_i32_0 = arith.constant 0 : i32
    %c0_i32_1 = arith.constant 0 : i32
    return %c0_i32, %c0_i32_0 : i32, i32
  }
  func.func @transform_5(%arg0: i32, %arg1: i32) -> (i32, i32, i32) {
    %c0_i32 = arith.constant 0 : i32
    %c0_i32_0 = arith.constant 0 : i32
    return %arg0, %arg1, %c0_i32 : i32, i32, i32
  }
}

</mosaic_0001>

<llo_original>
// kernel: tpu_custom_call.1
$region0: #{tpu_custom_call.1}
  #allocation0 [shape = 'u32[]', space=smem, size = 0x4, offset = 0x4, fixed_abs, tag = 'smem constant byte address 0x4 - core index']
  #allocation1 [shape = 'u32[144,128]{1,0:T(1,128)}', space=vmem, size = 0x12000, scoped, tag = 'internal scratch']
  %s0 = inlined_call_operand.hbm [shape: bf16[2,16,16,8], index: 0, kind: input, shape index: {}]
  %s1 = inlined_call_operand.hbm [shape: bf16[2,16,16,8], index: 1, kind: input, shape index: {}]
  %s2 = inlined_call_operand.hbm [shape: bf16[2,16,16,8], index: 2, kind: input, shape index: {}]
  %s3 = inlined_call_operand.hbm [shape: bf16[72,16], index: 3, kind: input, shape index: {}]
  %s4 = inlined_call_operand.hbm [shape: f32[1,16], index: 4, kind: input, shape index: {}]
  %s5 = inlined_call_operand.hbm [shape: bf16[2,256,16], index: 5, kind: output, shape index: {}]
  %s6 = sld [smem:[#allocation0]]
  $region73: #{tpu_custom_call.1} parent=0
    _
  %s8 = ssub.s32 1, %s6
  %s9 = scalar_select 0, %s8, %s6
  $region1: #{tpu_custom_call.1} parent=0
    #allocation2 [shape = 'u8[8192]{0}', space=vmem, size = 0x2000, scoped, tag = 'input window, operand 0']
    #allocation3 [shape = 's32[2]{0}', space=sflag, size = 0x8, scoped, tag = 'scoped memory for tpu_custom_call.1']
    #allocation4 [shape = 's32[2]{0}', space=sflag, size = 0x8, scoped, tag = 'scoped memory for tpu_custom_call.1']
    #allocation5 [shape = 'u8[32768]{0}', space=vmem, size = 0x8000, scoped, tag = 'input window, operand 1']
    #allocation6 [shape = 's32[2]{0}', space=sflag, size = 0x8, scoped, tag = 'scoped memory for tpu_custom_call.1']
    #allocation7 [shape = 'u8[8192]{0}', space=vmem, size = 0x2000, scoped, tag = 'input window, operand 2']
    #allocation8 [shape = 'u8[18432]{0}', space=vmem, size = 0x4800, scoped, tag = 'input window, operand 3, single buffered']
    #allocation9 [shape = 's32[1]{0}', space=sflag, size = 0x4, scoped, tag = 'scoped memory for tpu_custom_call.1']
    #allocation10 [shape = 'u8[512]{0}', space=vmem, size = 0x400, scoped, tag = 'input window, operand 4, single buffered']
    #allocation11 [shape = 'u8[32768]{0}', space=vmem, size = 0x8000, scoped, tag = 'output window, operand 0']
    %10 = vsyncpa [#allocation3], 0
    %s11 = scalar_lea.sflag [#allocation3], 1
    %12 = vsyncpa %s11, 0
    %13 = vsyncpa [#allocation6], 0
    %s14 = scalar_lea.sflag [#allocation6], 1
    %15 = vsyncpa %s14, 0
    %16 = vsyncpa [#allocation9], 0
    %17 = vsyncpa [#allocation4], 0
    %s18 = scalar_lea.sflag [#allocation4], 1
    %19 = vsyncpa %s18, 0
    loop: start=0, step=1, limit=10
    $region2: #{tpu_custom_call.1} parent=1 // loop_pre_header
      _
    $region3: #{tpu_custom_call.1} parent=1 // loop_header
      %s21 = sphi 0, %s25
      %p22 = scmp.ge.s32.totalorder %s21, 10
      %s28 = sphi 0, %s40
      %s29 = sphi 0, %s36
      %s30 = sphi 0, %s28
      %s31 = sphi 0, %s29
      %s32 = sphi 0, %s30
      %s33 = sphi 0, %s31
      %s53 = sphi 0, %s55
      %s56 = sphi 0, %s53
      %s57 = sphi 0, %s56
      %s73 = sphi 0, %s57
      %s81 = sphi 0, %s83
      %s84 = sphi 0, %s81
      %s85 = sphi 0, %s84
      %s101 = sphi 0, %s85
      %s117 = sphi 0, %s119
      %s120 = sphi 0, %s117
      %s121 = sphi 0, %s120
      %s137 = sphi 0, %s121
      %s141 = sphi 0, %s141
      %s143 = sphi 0, %s141
      %s144 = sphi 0, %s143
      %s158 = sphi 0, %s144
      %s162 = sphi 0, %s162
      %s164 = sphi 0, %s162
      %s165 = sphi 0, %s164
      %s179 = sphi 0, %s165
      %s187 = sphi 0, %s189
      %s190 = sphi 0, %s187
      %s191 = sphi 0, %s190
      %s207 = sphi 0, %s191
    $region4: #{tpu_custom_call.1} parent=1 // loop_header_branch
      %24 = sbr.rel (%p22) target = $region8
    $region5: #{tpu_custom_call.1} parent=1 // loop_body
      %s26 = ssub.s32 %s21, 1
      %s27 = ssub.s32 %s21, 2
      %s34 = sadd.s32 1, %s29
      %p35 = scmp.ge.s32.totalorder %s34, 4
      %s36 = scalar_select %p35, 0, %s34
      %s37 = sadd.s32 1, %s28
      %s38 = scalar_select %p35, %s37, %s28
      %p39 = scmp.ge.s32.totalorder %s38, 2
      %s40 = scalar_select %p39, 0, %s38
      %s41 = smul.u32 %s29, 4
      %s42 = ssub.s32 %s41, 1
      %p43 = scmp.gt.s32.totalorder %s42, 0
      %s44 = scalar_select %p43, %s42, 0
      %s45 = smul.u32 %s36, 4
      %s46 = ssub.s32 %s45, 1
      %p47 = scmp.gt.s32.totalorder %s46, 0
      %s48 = scalar_select %p47, %s46, 0
      %s49 = ssub.s32 %s28, %s40
      %s50 = ssub.s32 %s44, %s48
      %s51 = sor.u32 %s49, %s50
      %p52 = scmp.eq.s32.totalorder %s51, 0
      %s54 = sadd.s32 %s53, 1
      %s55 = scalar_select %p52, %s53, %s54
      %p58 = pneg %p52
      %p59 = scmp.eq.s32.totalorder %s21, 7
      %p60 = por %p58, %p59
      %p61 = scmp.ne.s32.totalorder %s53, %s56
      %p62 = scmp.eq.s32.totalorder %s21, 0
      %p63 = por %p61, %p62
      %p64 = scmp.ne.s32.totalorder %s53, %s56
      %p65 = scmp.eq.s32.totalorder %s26, 7
      %p66 = por %p64, %p65
      %p67 = scmp.ne.s32.totalorder %s56, %s57
      %p68 = scmp.eq.s32.totalorder %s26, 0
      %p69 = por %p67, %p68
      %p70 = scmp.ne.s32.totalorder %s56, %s57
      %p71 = scmp.eq.s32.totalorder %s27, 7
      %p72 = por %p70, %p71
      %p74 = scmp.ne.s32.totalorder %s57, %s73
      %p75 = scmp.eq.s32.totalorder %s27, 0
      %p76 = por %p74, %p75
      %s77 = ssub.s32 %s28, %s40
      %s78 = ssub.s32 %s29, %s36
      %s79 = sor.u32 %s77, %s78
      %p80 = scmp.eq.s32.totalorder %s79, 0
      %s82 = sadd.s32 %s81, 1
      %s83 = scalar_select %p80, %s81, %s82
      %p86 = pneg %p80
      %p87 = scmp.eq.s32.totalorder %s21, 7
      %p88 = por %p86, %p87
      %p89 = scmp.ne.s32.totalorder %s81, %s84
      %p90 = scmp.eq.s32.totalorder %s21, 0
      %p91 = por %p89, %p90
      %p92 = scmp.ne.s32.totalorder %s81, %s84
      %p93 = scmp.eq.s32.totalorder %s26, 7
      %p94 = por %p92, %p93
      %p95 = scmp.ne.s32.totalorder %s84, %s85
      %p96 = scmp.eq.s32.totalorder %s26, 0
      %p97 = por %p95, %p96
      %p98 = scmp.ne.s32.totalorder %s84, %s85
      %p99 = scmp.eq.s32.totalorder %s27, 7
      %p100 = por %p98, %p99
      %p102 = scmp.ne.s32.totalorder %s85, %s101
      %p103 = scmp.eq.s32.totalorder %s27, 0
      %p104 = por %p102, %p103
      %s105 = sadd.s32 %s29, 1
      %s106 = smul.u32 %s105, 4
      %p107 = scmp.lt.s32.totalorder %s106, 15
      %s108 = scalar_select %p107, %s106, 15
      %s109 = sadd.s32 %s36, 1
      %s110 = smul.u32 %s109, 4
      %p111 = scmp.lt.s32.totalorder %s110, 15
      %s112 = scalar_select %p111, %s110, 15
      %s113 = ssub.s32 %s28, %s40
      %s114 = ssub.s32 %s108, %s112
      %s115 = sor.u32 %s113, %s114
      %p116 = scmp.eq.s32.totalorder %s115, 0
      %s118 = sadd.s32 %s117, 1
      %s119 = scalar_select %p116, %s117, %s118
      %p122 = pneg %p116
      %p123 = scmp.eq.s32.totalorder %s21, 7
      %p124 = por %p122, %p123
      %p125 = scmp.ne.s32.totalorder %s117, %s120
      %p126 = scmp.eq.s32.totalorder %s21, 0
      %p127 = por %p125, %p126
      %p128 = scmp.ne.s32.totalorder %s117, %s120
      %p129 = scmp.eq.s32.totalorder %s26, 7
      %p130 = por %p128, %p129
      %p131 = scmp.ne.s32.totalorder %s120, %s121
      %p132 = scmp.eq.s32.totalorder %s26, 0
      %p133 = por %p131, %p132
      %p134 = scmp.ne.s32.totalorder %s120, %s121
      %p135 = scmp.eq.s32.totalorder %s27, 7
      %p136 = por %p134, %p135
      %p138 = scmp.ne.s32.totalorder %s121, %s137
      %p139 = scmp.eq.s32.totalorder %s27, 0
      %p140 = por %p138, %p139
      %s142 = sadd.s32 %s141, 1
      %p145 = scmp.eq.s32.totalorder %s21, 7
      %p146 = scmp.ne.s32.totalorder %s141, %s143
      %p147 = scmp.eq.s32.totalorder %s21, 0
      %p148 = por %p146, %p147
      %p149 = scmp.ne.s32.totalorder %s141, %s143
      %p150 = scmp.eq.s32.totalorder %s26, 7
      %p151 = por %p149, %p150
      %p152 = scmp.ne.s32.totalorder %s143, %s144
      %p153 = scmp.eq.s32.totalorder %s26, 0
      %p154 = por %p152, %p153
      %p155 = scmp.ne.s32.totalorder %s143, %s144
      %p156 = scmp.eq.s32.totalorder %s27, 7
      %p157 = por %p155, %p156
      %p159 = scmp.ne.s32.totalorder %s144, %s158
      %p160 = scmp.eq.s32.totalorder %s27, 0
      %p161 = por %p159, %p160
      %s163 = sadd.s32 %s162, 1
      %p166 = scmp.eq.s32.totalorder %s21, 7
      %p167 = scmp.ne.s32.totalorder %s162, %s164
      %p168 = scmp.eq.s32.totalorder %s21, 0
      %p169 = por %p167, %p168
      %p170 = scmp.ne.s32.totalorder %s162, %s164
      %p171 = scmp.eq.s32.totalorder %s26, 7
      %p172 = por %p170, %p171
      %p173 = scmp.ne.s32.totalorder %s164, %s165
      %p174 = scmp.eq.s32.totalorder %s26, 0
      %p175 = por %p173, %p174
      %p176 = scmp.ne.s32.totalorder %s164, %s165
      %p177 = scmp.eq.s32.totalorder %s27, 7
      %p178 = por %p176, %p177
      %p180 = scmp.ne.s32.totalorder %s165, %s179
      %p181 = scmp.eq.s32.totalorder %s27, 0
      %p182 = por %p180, %p181
      %s183 = ssub.s32 %s28, %s40
      %s184 = ssub.s32 %s29, %s36
      %s185 = sor.u32 %s183, %s184
      %p186 = scmp.eq.s32.totalorder %s185, 0
      %s188 = sadd.s32 %s187, 1
      %s189 = scalar_select %p186, %s187, %s188
      %p192 = pneg %p186
      %p193 = scmp.eq.s32.totalorder %s21, 7
      %p194 = por %p192, %p193
      %p195 = scmp.ne.s32.totalorder %s187, %s190
      %p196 = scmp.eq.s32.totalorder %s21, 0
      %p197 = por %p195, %p196
      %p198 = scmp.ne.s32.totalorder %s187, %s190
      %p199 = scmp.eq.s32.totalorder %s26, 7
      %p200 = por %p198, %p199
      %p201 = scmp.ne.s32.totalorder %s190, %s191
      %p202 = scmp.eq.s32.totalorder %s26, 0
      %p203 = por %p201, %p202
      %p204 = scmp.ne.s32.totalorder %s190, %s191
      %p205 = scmp.eq.s32.totalorder %s27, 7
      %p206 = por %p204, %p205
      %p208 = scmp.ne.s32.totalorder %s191, %s207
      %p209 = scmp.eq.s32.totalorder %s27, 0
      %p210 = por %p208, %p209
      %p211 = scmp.le.s32.totalorder 1, %s21
      %p212 = scmp.lt.s32.totalorder %s21, 9
      %p213 = pnand %p211, %p212
      %p214 = pneg %p213
      // Predicated region
      $region9: #{tpu_custom_call.1} parent=5 // pred_check
        _
      $region10: #{tpu_custom_call.1} parent=5 // pred_check_branch
        %216 = sbr.rel (%p213) target = $region12
      $region11: #{tpu_custom_call.1} parent=5 // pred_region
        %s217 = ssub.s32 %s21, 1
        // Predicated region
        $region13: #{tpu_custom_call.1} parent=11 // pred_check
          %p218 = pneg %p154
        $region14: #{tpu_custom_call.1} parent=11 // pred_check_branch
          %220 = sbr.rel (%p218) target = $region16
        $region15: #{tpu_custom_call.1} parent=11 // pred_region
          %s222 = ssub.s32 576, 576
          %223 = vsyncadd [#allocation9], %s222
          %s224 = sshll.u32 [#allocation8], 4
          %s225 = int_to_ptr.vmem [resolvable:$true] %s224
          %230 = dma.hbm_to_vmem [thread:$0]  %s3, 576, %s225, [#allocation9], 64, 64, 4
        $region16: #{tpu_custom_call.1} parent=11 // pred_fallthru
          _
        // Predicated region
        $region17: #{tpu_custom_call.1} parent=11 // pred_check
          %p231 = pneg %p175
        $region18: #{tpu_custom_call.1} parent=11 // pred_check_branch
          %233 = sbr.rel (%p231) target = $region20
        $region19: #{tpu_custom_call.1} parent=11 // pred_region
          %s235 = ssub.s32 16, 16
          %236 = vsyncadd [#allocation9], %s235
          %s238 = sshll.u32 [#allocation10], 4
          %s239 = int_to_ptr.vmem [resolvable:$true] %s238
          %241 = dma.hbm_to_vmem [thread:$0]  %s4, 16, %s239, [#allocation9]
        $region20: #{tpu_custom_call.1} parent=11 // pred_fallthru
          _
      $region12: #{tpu_custom_call.1} parent=5 // pred_fallthru
        _
      %p242 = scmp.lt.s32.totalorder %s21, 8
      // Predicated region
      $region21: #{tpu_custom_call.1} parent=5 // pred_check
        %p243 = pneg %p242
      $region22: #{tpu_custom_call.1} parent=5 // pred_check_branch
        %245 = sbr.rel (%p243) target = $region24
      $region23: #{tpu_custom_call.1} parent=5 // pred_region
        // Predicated region
        $region25: #{tpu_custom_call.1} parent=23 // pred_check
          %p246 = pneg %p63
        $region26: #{tpu_custom_call.1} parent=23 // pred_check_branch
          %248 = sbr.rel (%p246) target = $region28
        $region27: #{tpu_custom_call.1} parent=23 // pred_region
          %s249 = sand.u32 %s53, 1
          %s250 = scalar_lea.sflag [#allocation3], %s249
          %s251 = sand.u32 %s53, 1
          %s252 = smul.addr %s251, 8
          %s253 = scalar_lea.vmem [#allocation2], %s252
          %s254 = smul.u32 %s29, 4
          %s255 = ssub.s32 %s254, 1
          %p256 = scmp.gt.s32.totalorder %s255, 0
          %s257 = scalar_select %p256, %s255, 0
          %s259 = ssub.s32 128, 128
          %260 = vsyncadd %s250, %s259
          %s261 = smul.addr %s257, 2
          %s262 = smul.addr %s28, 32
          %s263 = sadd.s32 %s261, %s262
          %s264 = smul.addr %s263, 64
          %s265 = scalar_lea.hbm %s0, %s264
          %s266 = sshll.u32 %s253, 4
          %s267 = int_to_ptr.vmem [resolvable:$true] %s266
          %272 = dma.hbm_to_vmem [thread:$0]  %s265, 128, %s267, %s250, 64, 64, 4
        $region28: #{tpu_custom_call.1} parent=23 // pred_fallthru
          _
        // Predicated region
        $region29: #{tpu_custom_call.1} parent=23 // pred_check
          %p273 = pneg %p91
        $region30: #{tpu_custom_call.1} parent=23 // pred_check_branch
          %275 = sbr.rel (%p273) target = $region32
        $region31: #{tpu_custom_call.1} parent=23 // pred_region
          %s276 = sand.u32 %s21, 1
          %s277 = scalar_lea.sflag [#allocation6], %s276
          %s278 = sand.u32 %s81, 1
          %s279 = smul.addr %s278, 32
          %s280 = scalar_lea.vmem [#allocation5], %s279
          %s281 = smul.u32 4, %s29
          %s283 = ssub.s32 512, 512
          %284 = vsyncadd %s277, %s283
          %s285 = smul.addr %s281, 2
          %s286 = smul.addr %s28, 32
          %s287 = sadd.s32 %s285, %s286
          %s288 = smul.addr %s287, 64
          %s289 = scalar_lea.hbm %s1, %s288
          %s290 = sshll.u32 %s280, 4
          %s291 = int_to_ptr.vmem [resolvable:$true] %s290
          %296 = dma.hbm_to_vmem [thread:$0]  %s289, 512, %s291, %s277, 64, 64, 4
        $region32: #{tpu_custom_call.1} parent=23 // pred_fallthru
          _
        // Predicated region
        $region33: #{tpu_custom_call.1} parent=23 // pred_check
          %p297 = pneg %p127
        $region34: #{tpu_custom_call.1} parent=23 // pred_check_branch
          %299 = sbr.rel (%p297) target = $region36
        $region35: #{tpu_custom_call.1} parent=23 // pred_region
          %s300 = sand.u32 %s21, 1
          %s301 = scalar_lea.sflag [#allocation6], %s300
          %s302 = sand.u32 %s117, 1
          %s303 = smul.addr %s302, 8
          %s304 = scalar_lea.vmem [#allocation7], %s303
          %s305 = sadd.s32 %s29, 1
          %s306 = smul.u32 %s305, 4
          %p307 = scmp.lt.s32.totalorder %s306, 15
          %s308 = scalar_select %p307, %s306, 15
          %s310 = ssub.s32 128, 128
          %311 = vsyncadd %s301, %s310
          %s312 = smul.addr %s308, 2
          %s313 = smul.addr %s28, 32
          %s314 = sadd.s32 %s312, %s313
          %s315 = smul.addr %s314, 64
          %s316 = scalar_lea.hbm %s2, %s315
          %s317 = sshll.u32 %s304, 4
          %s318 = int_to_ptr.vmem [resolvable:$true] %s317
          %323 = dma.hbm_to_vmem [thread:$0]  %s316, 128, %s318, %s301, 64, 64, 4
        $region36: #{tpu_custom_call.1} parent=23 // pred_fallthru
          _
      $region24: #{tpu_custom_call.1} parent=5 // pred_fallthru
        _
      %p324 = scmp.le.s32.totalorder 1, %s21
      %p325 = scmp.lt.s32.totalorder %s21, 9
      %p326 = pnand %p324, %p325
      %p327 = pneg %p326
      // Predicated region
      $region37: #{tpu_custom_call.1} parent=5 // pred_check
        _
      $region38: #{tpu_custom_call.1} parent=5 // pred_check_branch
        %329 = sbr.rel (%p326) target = $region40
      $region39: #{tpu_custom_call.1} parent=5 // pred_region
        %s330 = ssub.s32 %s21, 1
        %s331 = sand.u32 %s56, 1
        %s332 = scalar_lea.sflag [#allocation3], %s331
        %s333 = sand.u32 %s56, 1
        %s334 = smul.addr %s333, 8
        %s335 = scalar_lea.vmem [#allocation2], %s334
        // Predicated region
        $region41: #{tpu_custom_call.1} parent=39 // pred_check
          %p336 = pneg %p69
        $region42: #{tpu_custom_call.1} parent=39 // pred_check_branch
          %338 = sbr.rel (%p336) target = $region44
        $region43: #{tpu_custom_call.1} parent=39 // pred_region
          %339 = dma.done %s332, 128
        $region44: #{tpu_custom_call.1} parent=39 // pred_fallthru
          _
        %s340 = sand.u32 %s26, 1
        %s341 = scalar_lea.sflag [#allocation6], %s340
        %s342 = sand.u32 %s84, 1
        %s343 = smul.addr %s342, 32
        %s344 = scalar_lea.vmem [#allocation5], %s343
        // Predicated region
        $region45: #{tpu_custom_call.1} parent=39 // pred_check
          %p345 = pneg %p97
        $region46: #{tpu_custom_call.1} parent=39 // pred_check_branch
          %347 = sbr.rel (%p345) target = $region48
        $region47: #{tpu_custom_call.1} parent=39 // pred_region
          %348 = dma.done %s341, 512
        $region48: #{tpu_custom_call.1} parent=39 // pred_fallthru
          _
        %s349 = sand.u32 %s26, 1
        %s350 = scalar_lea.sflag [#allocation6], %s349
        %s351 = sand.u32 %s120, 1
        %s352 = smul.addr %s351, 8
        %s353 = scalar_lea.vmem [#allocation7], %s352
        // Predicated region
        $region49: #{tpu_custom_call.1} parent=39 // pred_check
          %p354 = pneg %p133
        $region50: #{tpu_custom_call.1} parent=39 // pred_check_branch
          %356 = sbr.rel (%p354) target = $region52
        $region51: #{tpu_custom_call.1} parent=39 // pred_region
          %357 = dma.done %s350, 128
        $region52: #{tpu_custom_call.1} parent=39 // pred_fallthru
          _
        // Predicated region
        $region53: #{tpu_custom_call.1} parent=39 // pred_check
          %p358 = pneg %p154
        $region54: #{tpu_custom_call.1} parent=39 // pred_check_branch
          %360 = sbr.rel (%p358) target = $region56
        $region55: #{tpu_custom_call.1} parent=39 // pred_region
          %361 = dma.done [#allocation9], 576
        $region56: #{tpu_custom_call.1} parent=39 // pred_fallthru
          _
        // Predicated region
        $region57: #{tpu_custom_call.1} parent=39 // pred_check
          %p362 = pneg %p175
        $region58: #{tpu_custom_call.1} parent=39 // pred_check_branch
          %364 = sbr.rel (%p362) target = $region60
        $region59: #{tpu_custom_call.1} parent=39 // pred_region
          %365 = dma.done [#allocation9], 16
        $region60: #{tpu_custom_call.1} parent=39 // pred_fallthru
          _
        %s366 = sand.u32 %s56, 1
        %s367 = scalar_lea.sflag [#allocation3], %s366
        %s368 = sand.u32 %s56, 1
        %s369 = smul.addr %s368, 8
        %s370 = scalar_lea.vmem [#allocation2], %s369
        %p371 = pneg %p69
        %p372 = pneg %p66
        %s373 = sand.u32 %s26, 1
        %s374 = scalar_lea.sflag [#allocation6], %s373
        %s375 = sand.u32 %s84, 1
        %s376 = smul.addr %s375, 32
        %s377 = scalar_lea.vmem [#allocation5], %s376
        %p378 = pneg %p97
        %p379 = pneg %p94
        %s380 = sand.u32 %s26, 1
        %s381 = scalar_lea.sflag [#allocation6], %s380
        %s382 = sand.u32 %s120, 1
        %s383 = smul.addr %s382, 8
        %s384 = scalar_lea.vmem [#allocation7], %s383
        %p385 = pneg %p133
        %p386 = pneg %p130
        %p387 = pneg %p154
        %p388 = pneg %p151
        %p389 = pneg %p175
        %p390 = pneg %p172
        %p391 = pneg %p203
        %p392 = pneg %p200
        %s393 = sand.u32 %s190, 1
        %s394 = scalar_lea.sflag [#allocation4], %s393
        %s395 = sand.u32 %s190, 1
        %s396 = smul.addr %s395, 32
        %s397 = scalar_lea.vmem [#allocation11], %s396
        %s398 = smul.u32 %s31, 4
        %s399 = ssub.s32 %s398, 1
        %p400 = scmp.gt.s32.totalorder %s399, 0
        %s401 = scalar_select %p400, %s399, 0
        %s402 = smul.u32 4, %s31
        %s403 = sadd.s32 %s31, 1
        %s404 = smul.u32 %s403, 4
        %p405 = scmp.lt.s32.totalorder %s404, 15
        %s406 = scalar_select %p405, %s404, 15
        %s407 = smul.u32 8, %s31
        %p409 = scmp.eq.s32.totalorder %s31, 0
        %v410 = vld [vmem:[%s335] sm:$0xf]
        %v411 = vld [vmem:[%s335 + $0x4] sm:$0xf]
        %s412 = scalar_select %p409, 1, 0
        %v413 = vstv %s412
        %vm414 = vcmp.eq.s32.totalorder %v413, 1
        %v415 = vsel %vm414, 0, %v410
        %v416 = vsel %vm414, 0, %v411
        %p417 = scmp.eq.s32.totalorder %s31, 3
        %v418 = vld [vmem:[%s353] sm:$0xf]
        %v419 = vld [vmem:[%s353 + $0x4] sm:$0xf]
        %s420 = scalar_select %p417, 1, 0
        %v421 = vstv %s420
        %vm422 = vcmp.eq.s32.totalorder %v421, 1
        %v423 = vsel %vm422, 0, %v418
        %v424 = vsel %vm422, 0, %v419
        %v425 = vld [vmem:[%s344] sm:$0xf]
        %v426 = vld [vmem:[%s344 + $0x4] sm:$0xf]
        %v427 = vld [vmem:[%s344 + $0x8] sm:$0xf]
        %v428 = vld [vmem:[%s344 + $0xc] sm:$0xf]
        %v429 = vld [vmem:[%s344 + $0x10] sm:$0xf]
        %v430 = vld [vmem:[%s344 + $0x14] sm:$0xf]
        %v431 = vld [vmem:[%s344 + $0x18] sm:$0xf]
        %v432 = vld [vmem:[%s344 + $0x1c] sm:$0xf]
        %v433 = vld [vmem:[#allocation8] sm:$0xf]
        %v434 = vld [vmem:[#allocation8 + $0x4] sm:$0xf]
        %v435 = vld [vmem:[#allocation8 + $0x8] sm:$0xf]
        %v436 = vld [vmem:[#allocation8 + $0xc] sm:$0xf]
        %v437 = vld [vmem:[#allocation8 + $0x10] sm:$0xf]
        %v438 = vld [vmem:[#allocation8 + $0x14] sm:$0xf]
        %v439 = vld [vmem:[#allocation8 + $0x18] sm:$0xf]
        %v440 = vld [vmem:[#allocation8 + $0x1c] sm:$0xf]
        %v441 = vld [vmem:[#allocation8 + $0x20] sm:$0xf]
        %v454 = vunpack.c.l.b16 %v415
        %v455 = vunpack.c.l.b16 %v416
        %v456 = vunpack.c.l.b16 %v425
        %v457 = vunpack.c.l.b16 %v426
        %v458 = vunpack.c.l.b16 %v427
        %v459 = vunpack.c.l.b16 %v428
        %v460 = vunpack.c.l.b16 %v429
        %v461 = vunpack.c.l.b16 %v430
        %v462 = vunpack.c.l.b16 %v431
        %v463 = vunpack.c.l.b16 %v432
        %v464 = vunpack.c.l.b16 %v423
        %v465 = vunpack.c.l.b16 %v424
        %v466 = vpack.c.b16 %v455, %v454
        %v467 = vpack.c.b16 %v457, %v456
        %v468 = vpack.c.b16 %v459, %v458
        %v469 = vpack.c.b16 %v461, %v460
        %v470 = vpack.c.b16 %v463, %v462
        %v471 = vpack.c.b16 %v465, %v464
        %v473 = vshrl.u32 %v466, 16
        %v475 = vrot.slane %v473, 7
        %v476 = vshll.u32 %v466, 16
        %v478 = vor.u32 %v475, %v476
        %v480 = vshrl.u32 %v467, 16
        %v482 = vrot.slane %v480, 7
        %v483 = vshll.u32 %v467, 16
        %v485 = vor.u32 %v482, %v483
        %v487 = vshrl.u32 %v468, 16
        %v489 = vrot.slane %v487, 7
        %v490 = vshll.u32 %v468, 16
        %v492 = vor.u32 %v489, %v490
        %v494 = vshrl.u32 %v469, 16
        %v496 = vrot.slane %v494, 7
        %v497 = vshll.u32 %v469, 16
        %v499 = vor.u32 %v496, %v497
        %v501 = vshrl.u32 %v470, 16
        %v503 = vrot.slane %v501, 7
        %v504 = vshll.u32 %v470, 16
        %v506 = vor.u32 %v503, %v504
        %v508 = vshrl.u32 %v471, 16
        %v510 = vrot.slane %v508, 7
        %v511 = vshll.u32 %v471, 16
        %v513 = vor.u32 %v510, %v511
        %vm520 = vcmask 1040384
        %vm521 = vsmask.f32 256
        %vm522 = vmand %vm520, %vm521
        %v523 = vsel %vm522, 0, %v478
        %v524 = vsel %vm522, 0, %v485
        %v525 = vsel %vm522, 0, %v492
        %v526 = vsel %vm522, 0, %v499
        %v527 = vsel %vm522, 0, %v506
        %v528 = vsel %vm522, 0, %v513
        %533 = vrot.lane.b32.xlu0 %v524, 8
        %v534 = vpop.permute.xlu0 %533
        %535 = vrot.lane.b32.xlu0 %v525, 8
        %v536 = vpop.permute.xlu0 %535
        %537 = vrot.lane.b32.xlu0 %v526, 8
        %v538 = vpop.permute.xlu0 %537
        %539 = vrot.lane.b32.xlu0 %v527, 8
        %v540 = vpop.permute.xlu0 %539
        %542 = vrot.lane.b32.xlu0 %v525, 16
        %v543 = vpop.permute.xlu0 %542
        %544 = vrot.lane.b32.xlu0 %v526, 16
        %v545 = vpop.permute.xlu0 %544
        %546 = vrot.lane.b32.xlu0 %v527, 16
        %v547 = vpop.permute.xlu0 %546
        %548 = vrot.lane.b32.xlu0 %v528, 16
        %v549 = vpop.permute.xlu0 %548
        %vm550 = vcmask 64512
        %v553 = vsel %vm550, %v523, %v534
        %v556 = vsel %vm550, %v524, %v536
        %v559 = vsel %vm550, %v525, %v538
        %v562 = vsel %vm550, %v526, %v540
        %vm563 = vcmask 130048
        %v565 = vsel %vm563, %v553, %v543
        %v567 = vsel %vm563, %v556, %v545
        %v569 = vsel %vm563, %v559, %v547
        %v571 = vsel %vm563, %v562, %v549
        %572 = vrot.lane.b32.xlu0 %v467, 8
        %v573 = vpop.permute.xlu0 %572
        %574 = vrot.lane.b32.xlu0 %v468, 8
        %v575 = vpop.permute.xlu0 %574
        %576 = vrot.lane.b32.xlu0 %v469, 8
        %v577 = vpop.permute.xlu0 %576
        %578 = vrot.lane.b32.xlu0 %v470, 8
        %v579 = vpop.permute.xlu0 %578
        %580 = vrot.lane.b32.xlu0 %v468, 16
        %v581 = vpop.permute.xlu0 %580
        %582 = vrot.lane.b32.xlu0 %v469, 16
        %v583 = vpop.permute.xlu0 %582
        %584 = vrot.lane.b32.xlu0 %v470, 16
        %v585 = vpop.permute.xlu0 %584
        %586 = vrot.lane.b32.xlu0 %v471, 16
        %v587 = vpop.permute.xlu0 %586
        %v589 = vsel %vm550, %v466, %v573
        %v591 = vsel %vm550, %v467, %v575
        %v593 = vsel %vm550, %v468, %v577
        %v595 = vsel %vm550, %v469, %v579
        %v597 = vsel %vm563, %v589, %v581
        %v599 = vsel %vm563, %v591, %v583
        %v601 = vsel %vm563, %v593, %v585
        %v603 = vsel %vm563, %v595, %v587
        %v607 = vunpack.c.l.b16 %v436
        %v608 = vunpack.c.l.b16 %v437
        %v609 = vunpack.c.l.b16 %v438
        %v610 = vpack.c.b16 %v608, %v607
        %v611 = vpack.c.b16 %v609, %v609
        %vm613 = vcmask 195584
        %v614 = vsel %vm613, %v597, 0
        %v616 = vsel %vm613, %v599, 0
        %v618 = vsel %vm613, %v601, 0
        %v620 = vsel %vm613, %v603, 0
        %vm622 = vcmask 1043456
        %v624 = vsel %vm622, %v611, 0
        %626 = vmatprep.subr.bf16.mxu0 0
        %627 = vmatpush1.bf16.msra.mxu0 %v610
        %628 = vmatprep.subr.bf16.mxu0 0
        %629 = vmatpush1.bf16.msra.mxu0 %v624
        %630 = vmatprep.subr.bf16.mxu0 0
        %631 = vmatpush1.bf16.msra.mxu0 0
        %632 = vmatprep.subr.bf16.mxu0 0
        %633 = vmatpush1.bf16.msra.mxu0 0
        %634 = vmatprep.subr.bf16.mxu0 0
        %635 = vmatpush1.bf16.msra.mxu0 0
        %636 = vmatprep.subr.bf16.mxu0 0
        %637 = vmatpush1.bf16.msra.mxu0 0
        %638 = vmatprep.subr.bf16.mxu0 0
        %639 = vmatpush1.bf16.msra.mxu0 0
        %640 = vmatprep.subr.bf16.mxu0 0
        %641 = vmatpush1.bf16.msra.mxu0 0
        %642 = vmatprep.subr.bf16.mxu0 0
        %643 = vmatpush1.bf16.msra.mxu0 0
        %644 = vmatprep.subr.bf16.mxu0 0
        %645 = vmatpush1.bf16.msra.mxu0 0
        %646 = vmatprep.subr.bf16.mxu0 0
        %647 = vmatpush1.bf16.msra.mxu0 0
        %648 = vmatprep.subr.bf16.mxu0 0
        %649 = vmatpush1.bf16.msra.mxu0 0
        %650 = vmatprep.subr.bf16.mxu0 0
        %651 = vmatpush1.bf16.msra.mxu0 0
        %652 = vmatprep.subr.bf16.mxu0 0
        %653 = vmatpush1.bf16.msra.mxu0 0
        %654 = vmatprep.subr.bf16.mxu0 0
        %655 = vmatpush1.bf16.msra.mxu0 0
        %656 = vmatprep.subr.bf16.mxu0 0
        %657 = vmatpush1.bf16.msra.mxu0 0
        %658 = vmatprep.mubr.bf16.mxu0 0
        %659 = vmatmul.mubr.bf16.gmra.mrb[0].mxu0 %v614
        %v660 = vpop.f32.mrb[0].mxu0
        %v661 = vadd.f32 0.0, %v660
        %v662 = vpop.f32.mrb[0].mxu0
        %v663 = vpop.f32.mrb[0].mxu0
        %v664 = vadd.f32 0.0, %v663
        %v665 = vpop.f32.mrb[0].mxu0
        %666 = vmatprep.mubr.bf16.mxu0 0
        %667 = vmatmul.mubr.bf16.gmra.mrb[0].mxu0 %v616
        %v668 = vpop.f32.mrb[0].mxu0
        %v669 = vadd.f32 0.0, %v668
        %v670 = vpop.f32.mrb[0].mxu0
        %v671 = vpop.f32.mrb[0].mxu0
        %v672 = vadd.f32 0.0, %v671
        %v673 = vpop.f32.mrb[0].mxu0
        %674 = vmatprep.mubr.bf16.mxu0 0
        %675 = vmatmul.mubr.bf16.gmra.mrb[0].mxu0 %v618
        %v676 = vpop.f32.mrb[0].mxu0
        %v677 = vadd.f32 0.0, %v676
        %v678 = vpop.f32.mrb[0].mxu0
        %v679 = vpop.f32.mrb[0].mxu0
        %v680 = vadd.f32 0.0, %v679
        %v681 = vpop.f32.mrb[0].mxu0
        %682 = vmatprep.mubr.bf16.mxu0 0
        %683 = vmatmul.mubr.bf16.gmra.mrb[0].mxu0 %v620
        %v684 = vpop.f32.mrb[0].mxu0
        %v685 = vadd.f32 0.0, %v684
        %v686 = vpop.f32.mrb[0].mxu0
        %v687 = vpop.f32.mrb[0].mxu0
        %v688 = vadd.f32 0.0, %v687
        %v689 = vpop.f32.mrb[0].mxu0
        %690 = vdwg.mxu0
        %v694 = vunpack.c.l.b16 %v433
        %v695 = vunpack.c.l.b16 %v434
        %v696 = vunpack.c.l.b16 %v435
        %v697 = vpack.c.b16 %v695, %v694
        %v698 = vpack.c.b16 %v696, %v696
        %v700 = vsel %vm613, %v565, 0
        %v702 = vsel %vm613, %v567, 0
        %v704 = vsel %vm613, %v569, 0
        %v706 = vsel %vm613, %v571, 0
        %v709 = vsel %vm622, %v698, 0
        %711 = vmatprep.subr.bf16.mxu0 0
        %712 = vmatpush1.bf16.msra.mxu0 %v697
        %713 = vmatprep.subr.bf16.mxu0 0
        %714 = vmatpush1.bf16.msra.mxu0 %v709
        %715 = vmatprep.subr.bf16.mxu0 0
        %716 = vmatpush1.bf16.msra.mxu0 0
        %717 = vmatprep.subr.bf16.mxu0 0
        %718 = vmatpush1.bf16.msra.mxu0 0
        %719 = vmatprep.subr.bf16.mxu0 0
        %720 = vmatpush1.bf16.msra.mxu0 0
        %721 = vmatprep.subr.bf16.mxu0 0
        %722 = vmatpush1.bf16.msra.mxu0 0
        %723 = vmatprep.subr.bf16.mxu0 0
        %724 = vmatpush1.bf16.msra.mxu0 0
        %725 = vmatprep.subr.bf16.mxu0 0
        %726 = vmatpush1.bf16.msra.mxu0 0
        %727 = vmatprep.subr.bf16.mxu0 0
        %728 = vmatpush1.bf16.msra.mxu0 0
        %729 = vmatprep.subr.bf16.mxu0 0
        %730 = vmatpush1.bf16.msra.mxu0 0
        %731 = vmatprep.subr.bf16.mxu0 0
        %732 = vmatpush1.bf16.msra.mxu0 0
        %733 = vmatprep.subr.bf16.mxu0 0
        %734 = vmatpush1.bf16.msra.mxu0 0
        %735 = vmatprep.subr.bf16.mxu0 0
        %736 = vmatpush1.bf16.msra.mxu0 0
        %737 = vmatprep.subr.bf16.mxu0 0
        %738 = vmatpush1.bf16.msra.mxu0 0
        %739 = vmatprep.subr.bf16.mxu0 0
        %740 = vmatpush1.bf16.msra.mxu0 0
        %741 = vmatprep.subr.bf16.mxu0 0
        %742 = vmatpush1.bf16.msra.mxu0 0
        %743 = vmatprep.mubr.bf16.mxu0 0
        %744 = vmatmul.mubr.bf16.gmra.mrb[0].mxu0 %v700
        %v745 = vpop.f32.mrb[0].mxu0
        %v746 = vadd.f32 %v661, %v745
        %v747 = vpop.f32.mrb[0].mxu0
        %v748 = vpop.f32.mrb[0].mxu0
        %v749 = vadd.f32 %v664, %v748
        %v750 = vpop.f32.mrb[0].mxu0
        %751 = vmatprep.mubr.bf16.mxu0 0
        %752 = vmatmul.mubr.bf16.gmra.mrb[0].mxu0 %v702
        %v753 = vpop.f32.mrb[0].mxu0
        %v754 = vadd.f32 %v669, %v753
        %v755 = vpop.f32.mrb[0].mxu0
        %v756 = vpop.f32.mrb[0].mxu0
        %v757 = vadd.f32 %v672, %v756
        %v758 = vpop.f32.mrb[0].mxu0
        %759 = vmatprep.mubr.bf16.mxu0 0
        %760 = vmatmul.mubr.bf16.gmra.mrb[0].mxu0 %v704
        %v761 = vpop.f32.mrb[0].mxu0
        %v762 = vadd.f32 %v677, %v761
        %v763 = vpop.f32.mrb[0].mxu0
        %v764 = vpop.f32.mrb[0].mxu0
        %v765 = vadd.f32 %v680, %v764
        %v766 = vpop.f32.mrb[0].mxu0
        %767 = vmatprep.mubr.bf16.mxu0 0
        %768 = vmatmul.mubr.bf16.gmra.mrb[0].mxu0 %v706
        %v769 = vpop.f32.mrb[0].mxu0
        %v770 = vadd.f32 %v685, %v769
        %v771 = vpop.f32.mrb[0].mxu0
        %v772 = vpop.f32.mrb[0].mxu0
        %v773 = vadd.f32 %v688, %v772
        %v774 = vpop.f32.mrb[0].mxu0
        %775 = vdwg.mxu0
        %v776 = vrot.slane %v476, 1
        %v777 = vor.u32 %v473, %v776
        %v778 = vrot.slane %v483, 1
        %v779 = vor.u32 %v480, %v778
        %v780 = vrot.slane %v490, 1
        %v781 = vor.u32 %v487, %v780
        %v782 = vrot.slane %v497, 1
        %v783 = vor.u32 %v494, %v782
        %v784 = vrot.slane %v504, 1
        %v785 = vor.u32 %v501, %v784
        %v786 = vrot.slane %v511, 1
        %v787 = vor.u32 %v508, %v786
        %vm794 = vcmask 1047552
        %vm795 = vsmask.f32 7424
        %vm796 = vmand %vm794, %vm795
        %v797 = vsel %vm796, %v777, 0
        %v798 = vsel %vm796, %v779, 0
        %v799 = vsel %vm796, %v781, 0
        %v800 = vsel %vm796, %v783, 0
        %v801 = vsel %vm796, %v785, 0
        %v802 = vsel %vm796, %v787, 0
        %807 = vrot.lane.b32.xlu0 %v798, 8
        %v808 = vpop.permute.xlu0 %807
        %809 = vrot.lane.b32.xlu0 %v799, 8
        %v810 = vpop.permute.xlu0 %809
        %811 = vrot.lane.b32.xlu0 %v800, 8
        %v812 = vpop.permute.xlu0 %811
        %813 = vrot.lane.b32.xlu0 %v801, 8
        %v814 = vpop.permute.xlu0 %813
        %816 = vrot.lane.b32.xlu0 %v799, 16
        %v817 = vpop.permute.xlu0 %816
        %818 = vrot.lane.b32.xlu0 %v800, 16
        %v819 = vpop.permute.xlu0 %818
        %820 = vrot.lane.b32.xlu0 %v801, 16
        %v821 = vpop.permute.xlu0 %820
        %822 = vrot.lane.b32.xlu0 %v802, 16
        %v823 = vpop.permute.xlu0 %822
        %v826 = vsel %vm550, %v797, %v808
        %v829 = vsel %vm550, %v798, %v810
        %v832 = vsel %vm550, %v799, %v812
        %v835 = vsel %vm550, %v800, %v814
        %v837 = vsel %vm563, %v826, %v817
        %v839 = vsel %vm563, %v829, %v819
        %v841 = vsel %vm563, %v832, %v821
        %v843 = vsel %vm563, %v835, %v823
        %v847 = vunpack.c.l.b16 %v439
        %v848 = vunpack.c.l.b16 %v440
        %v849 = vunpack.c.l.b16 %v441
        %v850 = vpack.c.b16 %v848, %v847
        %v851 = vpack.c.b16 %v849, %v849
        %v853 = vsel %vm613, %v837, 0
        %v855 = vsel %vm613, %v839, 0
        %v857 = vsel %vm613, %v841, 0
        %v859 = vsel %vm613, %v843, 0
        %v862 = vsel %vm622, %v851, 0
        %864 = vmatprep.subr.bf16.mxu0 0
        %865 = vmatpush1.bf16.msra.mxu0 %v850
        %866 = vmatprep.subr.bf16.mxu0 0
        %867 = vmatpush1.bf16.msra.mxu0 %v862
        %868 = vmatprep.subr.bf16.mxu0 0
        %869 = vmatpush1.bf16.msra.mxu0 0
        %870 = vmatprep.subr.bf16.mxu0 0
        %871 = vmatpush1.bf16.msra.mxu0 0
        %872 = vmatprep.subr.bf16.mxu0 0
        %873 = vmatpush1.bf16.msra.mxu0 0
        %874 = vmatprep.subr.bf16.mxu0 0
        %875 = vmatpush1.bf16.msra.mxu0 0
        %876 = vmatprep.subr.bf16.mxu0 0
        %877 = vmatpush1.bf16.msra.mxu0 0
        %878 = vmatprep.subr.bf16.mxu0 0
        %879 = vmatpush1.bf16.msra.mxu0 0
        %880 = vmatprep.subr.bf16.mxu0 0
        %881 = vmatpush1.bf16.msra.mxu0 0
        %882 = vmatprep.subr.bf16.mxu0 0
        %883 = vmatpush1.bf16.msra.mxu0 0
        %884 = vmatprep.subr.bf16.mxu0 0
        %885 = vmatpush1.bf16.msra.mxu0 0
        %886 = vmatprep.subr.bf16.mxu0 0
        %887 = vmatpush1.bf16.msra.mxu0 0
        %888 = vmatprep.subr.bf16.mxu0 0
        %889 = vmatpush1.bf16.msra.mxu0 0
        %890 = vmatprep.subr.bf16.mxu0 0
        %891 = vmatpush1.bf16.msra.mxu0 0
        %892 = vmatprep.subr.bf16.mxu0 0
        %893 = vmatpush1.bf16.msra.mxu0 0
        %894 = vmatprep.subr.bf16.mxu0 0
        %895 = vmatpush1.bf16.msra.mxu0 0
        %896 = vmatprep.mubr.bf16.mxu0 0
        %897 = vmatmul.mubr.bf16.gmra.mrb[0].mxu0 %v853
        %v898 = vpop.f32.mrb[0].mxu0
        %v899 = vadd.f32 0.0, %v898
        %v900 = vpop.f32.mrb[0].mxu0
        %v901 = vpop.f32.mrb[0].mxu0
        %v902 = vadd.f32 0.0, %v901
        %v903 = vpop.f32.mrb[0].mxu0
        %904 = vmatprep.mubr.bf16.mxu0 0
        %905 = vmatmul.mubr.bf16.gmra.mrb[0].mxu0 %v855
        %v906 = vpop.f32.mrb[0].mxu0
        %v907 = vadd.f32 0.0, %v906
        %v908 = vpop.f32.mrb[0].mxu0
        %v909 = vpop.f32.mrb[0].mxu0
        %v910 = vadd.f32 0.0, %v909
        %v911 = vpop.f32.mrb[0].mxu0
        %912 = vmatprep.mubr.bf16.mxu0 0
        %913 = vmatmul.mubr.bf16.gmra.mrb[0].mxu0 %v857
        %v914 = vpop.f32.mrb[0].mxu0
        %v915 = vadd.f32 0.0, %v914
        %v916 = vpop.f32.mrb[0].mxu0
        %v917 = vpop.f32.mrb[0].mxu0
        %v918 = vadd.f32 0.0, %v917
        %v919 = vpop.f32.mrb[0].mxu0
        %920 = vmatprep.mubr.bf16.mxu0 0
        %921 = vmatmul.mubr.bf16.gmra.mrb[0].mxu0 %v859
        %v922 = vpop.f32.mrb[0].mxu0
        %v923 = vadd.f32 0.0, %v922
        %v924 = vpop.f32.mrb[0].mxu0
        %v925 = vpop.f32.mrb[0].mxu0
        %v926 = vadd.f32 0.0, %v925
        %v927 = vpop.f32.mrb[0].mxu0
        %928 = vdwg.mxu0
        %v929 = vadd.f32 %v746, %v899
        %v930 = vadd.f32 %v749, %v902
        %v931 = vadd.f32 %v754, %v907
        %v932 = vadd.f32 %v757, %v910
        %v933 = vadd.f32 %v762, %v915
        %v934 = vadd.f32 %v765, %v918
        %v935 = vadd.f32 %v770, %v923
        %v936 = vadd.f32 %v773, %v926
        %v937 = vld [vmem:[#allocation10] sm:$0x1]
        %v939 = vlaneseq
        %v940 = vshrl.u32 %v939, 7
        %v941 = vsub.s32 0, %v940
        %v942 = vrot.slane %v937, %v941
        %v944 = vadd.f32 %v929, %v942
        %v945 = vadd.f32 %v930, %v942
        %v946 = vadd.f32 %v931, %v942
        %v947 = vadd.f32 %v932, %v942
        %v948 = vadd.f32 %v933, %v942
        %v949 = vadd.f32 %v934, %v942
        %v950 = vadd.f32 %v935, %v942
        %v951 = vadd.f32 %v936, %v942
        %v952 = vpack.c.bf16 %v945, %v944
        %v953 = vpack.c.bf16 %v947, %v946
        %v954 = vpack.c.bf16 %v949, %v948
        %v955 = vpack.c.bf16 %v951, %v950
        %v960 = vunpack.c.l.b16 %v952
        %v961 = vunpack.c.h.b16 %v952
        %v962 = vunpack.c.l.b16 %v953
        %v963 = vunpack.c.h.b16 %v953
        %v964 = vunpack.c.l.b16 %v954
        %v965 = vunpack.c.h.b16 %v954
        %v966 = vunpack.c.l.b16 %v955
        %v967 = vunpack.c.h.b16 %v955
        %v968 = vpack.c.b16 %v960, %v960
        %v969 = vpack.c.b16 %v961, %v961
        %v970 = vpack.c.b16 %v962, %v962
        %v971 = vpack.c.b16 %v963, %v963
        %v972 = vpack.c.b16 %v964, %v964
        %v973 = vpack.c.b16 %v965, %v965
        %v974 = vpack.c.b16 %v966, %v966
        %v975 = vpack.c.b16 %v967, %v967
        %vm984 = vcmask 125952
        %985 = vst.msk [vmem:[%s397] sm:$0xf] %vm984, %v968
        %986 = vst.msk [vmem:[%s397 + $0x4] sm:$0xf] %vm984, %v969
        %987 = vst.msk [vmem:[%s397 + $0x8] sm:$0xf] %vm984, %v970
        %988 = vst.msk [vmem:[%s397 + $0xc] sm:$0xf] %vm984, %v971
        %989 = vst.msk [vmem:[%s397 + $0x10] sm:$0xf] %vm984, %v972
        %990 = vst.msk [vmem:[%s397 + $0x14] sm:$0xf] %vm984, %v973
        %991 = vst.msk [vmem:[%s397 + $0x18] sm:$0xf] %vm984, %v974
        %992 = vst.msk [vmem:[%s397 + $0x1c] sm:$0xf] %vm984, %v975
        %s993 = sand.u32 %s190, 1
        %s994 = scalar_lea.sflag [#allocation4], %s993
        %s995 = sand.u32 %s190, 1
        %s996 = smul.addr %s995, 32
        %s997 = scalar_lea.vmem [#allocation11], %s996
        // Predicated region
        $region61: #{tpu_custom_call.1} parent=39 // pred_check
          %p998 = pneg %p200
        $region62: #{tpu_custom_call.1} parent=39 // pred_check_branch
          %1000 = sbr.rel (%p998) target = $region64
        $region63: #{tpu_custom_call.1} parent=39 // pred_region
          %s1001 = smul.u32 8, %s31
          %s1003 = ssub.s32 512, 512
          %1004 = vsyncadd %s994, %s1003
          %s1005 = smul.addr %s30, 32
          %s1006 = sadd.s32 %s1001, %s1005
          %s1007 = smul.addr %s1006, 64
          %s1008 = scalar_lea.hbm %s5, %s1007
          %s1009 = sshll.u32 %s997, 4
          %s1010 = int_to_ptr.vmem [resolvable:$true] %s1009
          %1015 = dma.vmem_to_hbm [thread:$0]  %s1010, 512, %s1008, %s994, 64, 64, 4
        $region64: #{tpu_custom_call.1} parent=39 // pred_fallthru
          _
      $region40: #{tpu_custom_call.1} parent=5 // pred_fallthru
        _
      %p1016 = scmp.le.s32.totalorder 2, %s21
      // Predicated region
      $region65: #{tpu_custom_call.1} parent=5 // pred_check
        %p1017 = pneg %p1016
      $region66: #{tpu_custom_call.1} parent=5 // pred_check_branch
        %1019 = sbr.rel (%p1017) target = $region68
      $region67: #{tpu_custom_call.1} parent=5 // pred_region
        %s1020 = ssub.s32 %s21, 2
        // Predicated region
        $region69: #{tpu_custom_call.1} parent=67 // pred_check
          %p1021 = pneg %p206
        $region70: #{tpu_custom_call.1} parent=67 // pred_check_branch
          %1023 = sbr.rel (%p1021) target = $region72
        $region71: #{tpu_custom_call.1} parent=67 // pred_region
          %s1024 = sand.u32 %s191, 1
          %s1025 = scalar_lea.sflag [#allocation4], %s1024
          %s1026 = sand.u32 %s191, 1
          %s1027 = smul.addr %s1026, 32
          %s1028 = scalar_lea.vmem [#allocation11], %s1027
          %1029 = dma.done %s1025, 512
        $region72: #{tpu_custom_call.1} parent=67 // pred_fallthru
          _
      $region68: #{tpu_custom_call.1} parent=5 // pred_fallthru
        _
    $region6: #{tpu_custom_call.1} parent=1 // loop_footer
      %s25 = sadd.s32 1, %s21
    $region7: #{tpu_custom_call.1} parent=1 // loop_footer_branch
      %20 = sbr.rel target = $region3
    $region8: #{tpu_custom_call.1} parent=1 // loop_exit
      _
    %1030 = vsyncpa [#allocation3], 1
    %s1031 = scalar_lea.sflag [#allocation3], 1
    %1032 = vsyncpa %s1031, 1
    %1033 = vsyncpa [#allocation6], 1
    %s1034 = scalar_lea.sflag [#allocation6], 1
    %1035 = vsyncpa %s1034, 1
    %1036 = vsyncpa [#allocation9], 1
    %1037 = vsyncpa [#allocation4], 1
    %s1038 = scalar_lea.sflag [#allocation4], 1
    %1039 = vsyncpa %s1038, 1

</llo_original>
